<compile_context>
chip_gen: v6e
topology: v6e:2x2x1
jax: 0.10.0
libtpu: 0.0.40
codegen_flags: <defaults>
</compile_context>

<pallas_src>
import math
from types import SimpleNamespace

import jax
import jax.numpy as jnp
from jax import lax
from jax.experimental import pallas as pl
from jax.experimental.pallas import tpu as pltpu


# ----------------------------------------------------------------------------
# small helpers
# ----------------------------------------------------------------------------
def _physical_vmem_bytes():
    try:
        return int(pltpu.get_tpu_info().vmem_capacity_bytes)
    except Exception:            # info query only; assume smallest (v7x)
        return 64 << 20


def _nbytes(shape, dtype):
    return math.prod(shape) * jnp.dtype(dtype).itemsize


def _apply_last_activation(h, last_activation):
    if last_activation == "tanh":
        return jnp.tanh(h)
    if last_activation == "sigmoid":
        return jax.nn.sigmoid(h)
    return h


def _gate_update(gates, c_prev):
    """PyTorch nn.LSTMCell gate math (gate order i, f, g, o)."""
    d = c_prev.shape[-1]
    i_g = jax.nn.sigmoid(gates[:, 0 * d:1 * d])
    f_g = jax.nn.sigmoid(gates[:, 1 * d:2 * d])
    g_g = jnp.tanh(gates[:, 2 * d:3 * d])
    o_g = jax.nn.sigmoid(gates[:, 3 * d:4 * d])
    c_new = f_g * c_prev + i_g * g_g
    h_new = o_g * jnp.tanh(c_new)
    return h_new, c_new


def _pick_gate_tiles_per_gate(d, max_tile_bytes=4 << 20):
    """Largest lane-aligned gate tile whose (D, TN) bf16 weight tile fits the
    per-tile streaming budget (tiles are double-buffered by the pipeline)."""
    fallback = 1
    for kpg in range(1, d // 128 + 1):
        if d % kpg or (d // kpg) % 128:
            continue
        fallback = kpg
        if d * (d // kpg) * 2 <= max_tile_bytes:
            return kpg
    return fallback


# ----------------------------------------------------------------------------
# Path 1: whole problem VMEM-resident, in-kernel time loop (small D)
# ----------------------------------------------------------------------------
def _make_small_kernel(seq_len, future_len, last_activation, num_dec_slabs):
    def kernel(gx_ref, whh_e_ref, w_dec_ref, b_d_ref, out_ref, h_sc, c_sc):
        h_sc[...] = jnp.zeros_like(h_sc)
        c_sc[...] = jnp.zeros_like(c_sc)

        # ----------------------------- encoder -----------------------------
        # Input projection (x @ W_ih^T + b) was hoisted into one big XLA
        # matmul (gx); only the recurrent h @ W_hh^T runs per step.
        def enc_body(t, carry):
            gates = gx_ref[t].astype(jnp.float32) + jnp.dot(
                h_sc[...].astype(jnp.bfloat16), whh_e_ref[...],
                preferred_element_type=jnp.float32)
            h_new, c_new = _gate_update(gates, c_sc[...])
            h_sc[...] = h_new
            c_sc[...] = c_new
            return carry

        lax.fori_loop(0, seq_len, enc_body, 0)

        # ----------------------------- decoder -----------------------------
        c_sc[...] = jnp.zeros_like(c_sc)          # c_d = 0, h_d = h_e

        def dec_step(t, slab):
            # slab 0: W_hh only (zero input); last slab: W_hh + W_ih pre-summed
            # (autoregressive feedback x_t == h_{t-1}) -> ONE matmul per step.
            gates = b_d_ref[...] + jnp.dot(
                h_sc[...].astype(jnp.bfloat16), w_dec_ref[slab],
                preferred_element_type=jnp.float32)
            h_new, c_new = _gate_update(gates, c_sc[...])
            h_new = _apply_last_activation(h_new, last_activation)
            h_sc[...] = h_new
            c_sc[...] = c_new
            out_ref[t] = h_new.astype(out_ref.dtype)

        dec_step(0, 0)                            # first input is always zero

        def dec_body(t, carry):
            dec_step(t, num_dec_slabs - 1)
            return carry

        lax.fori_loop(1, future_len, dec_body, 0)

    return kernel


def _run_small(gates_x, enc_whh_t, w_dec, dec_b, *, seq, future, bp, d,
               last_activation):
    num_slabs = w_dec.shape[0]
    kernel = _make_small_kernel(seq, future, last_activation, num_slabs)

    est = (2 * (_nbytes(gates_x.shape, gates_x.dtype)
                + _nbytes(enc_whh_t.shape, enc_whh_t.dtype)
                + _nbytes(w_dec.shape, w_dec.dtype)
                + _nbytes(dec_b.shape, dec_b.dtype)
                + _nbytes((future, bp, d), jnp.float32))
           + 2 * _nbytes((bp, d), jnp.float32)
           + (4 << 20))
    vmem_limit = min(est, _physical_vmem_bytes())

    return pl.pallas_call(
        kernel,
        out_shape=jax.ShapeDtypeStruct((future, bp, d), jnp.float32),
        grid=(1,),
        in_specs=[
            pl.BlockSpec((seq, bp, 4 * d), lambda i: (0, 0, 0)),     # gx (bf16)
            pl.BlockSpec((d, 4 * d), lambda i: (0, 0)),              # W_hh_enc^T
            pl.BlockSpec((num_slabs, d, 4 * d), lambda i: (0, 0, 0)),  # dec slabs
            pl.BlockSpec((1, 4 * d), lambda i: (0, 0)),              # dec bias
        ],
        out_specs=pl.BlockSpec((future, bp, d), lambda i: (0, 0, 0)),
        scratch_shapes=[
            pltpu.VMEM((bp, d), jnp.float32),     # h (resident, f32)
            pltpu.VMEM((bp, d), jnp.float32),     # c (resident, f32)
        ],
        compiler_params=pltpu.CompilerParams(
            dimension_semantics=("arbitrary",),
            vmem_limit_bytes=vmem_limit),
    )(gates_x, enc_whh_t, w_dec, dec_b)


# ----------------------------------------------------------------------------
# Path 2: per-step grid with gate-axis tiling (weight streaming, large D)
#   grid = (seq + future, 4 * kpg)     axes: (time, gate tile)   both arbitrary
# ----------------------------------------------------------------------------
def _make_grid_kernel(seq_len, last_activation, kpg, tn):
    n_tiles = 4 * kpg

    def kernel(gx_ref, whh_e_ref, w_dec_ref, b_d_ref, out_ref,
               h_sc, c_sc, g_acc):
        t = pl.program_id(0)          # time step (encoder then decoder)
        n = pl.program_id(1)          # gate-axis tile

        @pl.when((t == 0) & (n == 0))
        def _init():
            h_sc[...] = jnp.zeros_like(h_sc)
            c_sc[...] = jnp.zeros_like(c_sc)

        @pl.when((t == seq_len) & (n == 0))
        def _start_decoder():
            c_sc[...] = jnp.zeros_like(c_sc)      # c_d = 0 (h_d = h_e kept)

        is_enc = t < seq_len
        h_b = h_sc[...].astype(jnp.bfloat16)

        @pl.when(is_enc)
        def _enc_tile():
            g_acc[n] = gx_ref[0].astype(jnp.float32) + jnp.dot(
                h_b, whh_e_ref[...], preferred_element_type=jnp.float32)

        @pl.when(t >= seq_len)
        def _dec_tile():
            # ONE matmul per decoder step (pre-summed weight slab).
            g_acc[n] = b_d_ref[...] + jnp.dot(
                h_b, w_dec_ref[0], preferred_element_type=jnp.float32)

        @pl.when(n == n_tiles - 1)
        def _finalize():
            def update(is_decoder):
                for k in range(kpg):                      # static unroll
                    sl = slice(k * tn, (k + 1) * tn)
                    i_g = jax.nn.sigmoid(g_acc[0 * kpg + k])
                    f_g = jax.nn.sigmoid(g_acc[1 * kpg + k])
                    g_g = jnp.tanh(g_acc[2 * kpg + k])
                    o_g = jax.nn.sigmoid(g_acc[3 * kpg + k])
                    c_new = f_g * c_sc[:, sl] + i_g * g_g
                    h_new = o_g * jnp.tanh(c_new)
                    if is_decoder:
                        h_new = _apply_last_activation(h_new, last_activation)
                    c_sc[:, sl] = c_new
                    h_sc[:, sl] = h_new

            @pl.when(is_enc)
            def _enc_update():
                update(False)

            @pl.when(t >= seq_len)
            def _dec_update():
                update(True)
                out_ref[0] = h_sc[...].astype(out_ref.dtype)

    return kernel


def _run_grid(gates_x, enc_whh_t, w_dec, dec_b, *, seq, future, bp, d,
              last_activation, kpg):
    assert d % 128 == 0
    assert d % kpg == 0 and (d // kpg) % 128 == 0
    tn = d // kpg
    n_tiles = 4 * kpg
    num_slabs = w_dec.shape[0]
    total_steps = seq + future
    kernel = _make_grid_kernel(seq, last_activation, kpg, tn)

    w_tile = _nbytes((d, tn), jnp.bfloat16)
    est = (2 * (2 * w_tile                                  # enc + dec tiles
                + _nbytes((1, bp, tn), gates_x.dtype)       # gx block
                + _nbytes((1, tn), jnp.float32)             # bias block
                + _nbytes((1, bp, d), jnp.float32))         # out block
           + 2 * _nbytes((bp, d), jnp.float32)              # h, c
           + _nbytes((n_tiles, bp, tn), jnp.float32)        # gate accumulator
           + (8 << 20))
    vmem_limit = min(est, _physical_vmem_bytes())

    # Index maps: during the "other" phase a weight's block index is frozen so
    # it is simply revisited (no wasted per-step DMA of the unused weight).
    gx_spec = pl.BlockSpec(
        (1, bp, tn),
        lambda t, n: (jnp.minimum(t, seq - 1), 0,
                      jnp.where(t < seq, n, n_tiles - 1)))
    enc_w_spec = pl.BlockSpec(
        (d, tn), lambda t, n: (0, jnp.where(t < seq, n, n_tiles - 1)))
    dec_w_spec = pl.BlockSpec(
        (1, d, tn),
        lambda t, n: (jnp.where(t > seq, num_slabs - 1, 0), 0,
                      jnp.where(t < seq, 0, n)))
    b_spec = pl.BlockSpec((1, tn), lambda t, n: (0, jnp.where(t < seq, 0, n)))
    out_spec = pl.BlockSpec((1, bp, d),
                            lambda t, n: (jnp.maximum(t - seq, 0), 0, 0))

    return pl.pallas_call(
        kernel,
        out_shape=jax.ShapeDtypeStruct((future, bp, d), jnp.float32),
        grid=(total_steps, n_tiles),
        in_specs=[gx_spec, enc_w_spec, dec_w_spec, b_spec],
        out_specs=out_spec,
        scratch_shapes=[
            pltpu.VMEM((bp, d), jnp.float32),             # h (resident)
            pltpu.VMEM((bp, d), jnp.float32),             # c (resident)
            pltpu.VMEM((n_tiles, bp, tn), jnp.float32),   # per-step gate acc
        ],
        compiler_params=pltpu.CompilerParams(
            dimension_semantics=("arbitrary", "arbitrary"),
            vmem_limit_bytes=vmem_limit),
    )(gates_x, enc_whh_t, w_dec, dec_b)


# ----------------------------------------------------------------------------
# Parameter construction (deterministic, matching nn.LSTMCell shapes)
# ----------------------------------------------------------------------------
def init_fc_lstm_params(key, d):
    scale = 1.0 / jnp.sqrt(jnp.float32(d))
    ks = jax.random.split(key, 8)

    def u(k, shape):
        return jax.random.uniform(k, shape, jnp.float32, -scale, scale)

    return {
        "enc": {"w_ih": u(ks[0], (4 * d, d)), "w_hh": u(ks[1], (4 * d, d)),
                "b_ih": u(ks[2], (4 * d,)), "b_hh": u(ks[3], (4 * d,))},
        "dec": {"w_ih": u(ks[4], (4 * d, d)), "w_hh": u(ks[5], (4 * d, d)),
                "b_ih": u(ks[6], (4 * d,)), "b_hh": u(ks[7], (4 * d,))},
    }


# ----------------------------------------------------------------------------
# Forward wrapper
# ----------------------------------------------------------------------------
def fc_lstm_forward(x, params, args, future_step=10, *,
                    force_path=None, gate_tiles_per_gate=None):
    """x: (seq, batch, H, W) float32 -> (seq, batch, H, W) float32."""
    seq, b0, hh, ww = x.shape
    d = hh * ww
    # As in the PyTorch module, the final reshape requires future_step == seq.
    assert future_step == seq, "outputs are reshaped with seq_size"
    assert d % 128 == 0, "hidden size must be lane-aligned (multiple of 128)"

    # Batch packing: pad to the f32 sublane count (>= 8).  For real workloads,
    # pack independent sequences toward 128 (v5e) / 256 (v6e, v7x) rows.
    bp = max(8, ((b0 + 7) // 8) * 8)
    x_flat = x.reshape(seq, b0, d).astype(jnp.float32)
    if bp != b0:
        x_flat = jnp.pad(x_flat, ((0, 0), (0, bp - b0), (0, 0)))

    # Weights pre-transposed to (D, 4D) and cast to bf16; biases f32.
    wdt = jnp.bfloat16
    enc_wih_t = params["enc"]["w_ih"].T.astype(wdt)
    enc_whh_t = params["enc"]["w_hh"].T.astype(wdt)
    dec_whh_t = params["dec"]["w_hh"].T.astype(wdt)
    enc_b = (params["enc"]["b_ih"] + params["enc"]["b_hh"]
             ).reshape(1, 4 * d).astype(jnp.float32)
    dec_b = (params["dec"]["b_ih"] + params["dec"]["b_hh"]
             ).reshape(1, 4 * d).astype(jnp.float32)

    zero_input = bool(args.zero_input)
    if zero_input:
        w_dec = dec_whh_t[None]                          # (1, D, 4D)
    else:
        dec_sum_t = (params["dec"]["w_hh"] + params["dec"]["w_ih"]
                     ).T.astype(wdt)
        w_dec = jnp.stack([dec_whh_t, dec_sum_t])        # (2, D, 4D)

    # Hoisted encoder input projection (dense, non-recurrent -> plain XLA).
    gates_x = (jnp.dot(x_flat.reshape(seq * bp, d).astype(wdt), enc_wih_t,
                       preferred_element_type=jnp.float32) + enc_b)
    gates_x = gates_x.astype(jnp.bfloat16).reshape(seq, bp, 4 * d)

    # Path selection: fully-resident small path vs. weight-streaming grid path.
    num_slabs = w_dec.shape[0]
    resident_bytes = (2 * (_nbytes(gates_x.shape, jnp.bfloat16)
                           + _nbytes((d, 4 * d), wdt) * (1 + num_slabs)
                           + _nbytes((future_step, bp, d), jnp.float32))
                      + 2 * _nbytes((bp, d), jnp.float32))
    if force_path is None:
        use_small = resident_bytes <= min(_physical_vmem_bytes() // 2, 48 << 20)
    else:
        use_small = (force_path == "small")

    if use_small:
        out = _run_small(gates_x, enc_whh_t, w_dec, dec_b, seq=seq,
                         future=future_step, bp=bp, d=d,
                         last_activation=args.last_activation)
    else:
        kpg = gate_tiles_per_gate or _pick_gate_tiles_per_gate(d)
        out = _run_grid(gates_x, enc_whh_t, w_dec, dec_b, seq=seq,
                        future=future_step, bp=bp, d=d,
                        last_activation=args.last_activation, kpg=kpg)

    return out[:, :b0].reshape(seq, b0, hh, ww)


# ----------------------------------------------------------------------------
# Pure-JAX reference (identical numeric recipe, no Pallas)
# ----------------------------------------------------------------------------
def fc_lstm_reference(x, params, args, future_step=10):
    seq, b, hh, ww = x.shape
    d = hh * ww
    wdt = jnp.bfloat16
    xf = x.reshape(seq, b, d).astype(jnp.float32)

    e_wih = params["enc"]["w_ih"].T.astype(wdt)
    e_whh = params["enc"]["w_hh"].T.astype(wdt)
    d_whh = params["dec"]["w_hh"].T.astype(wdt)
    d_sum = (params["dec"]["w_hh"] + params["dec"]["w_ih"]).T.astype(wdt)
    e_b = (params["enc"]["b_ih"] + params["enc"]["b_hh"]
           ).reshape(1, 4 * d).astype(jnp.float32)
    d_b = (params["dec"]["b_ih"] + params["dec"]["b_hh"]
           ).reshape(1, 4 * d).astype(jnp.float32)

    gx = (jnp.dot(xf.reshape(seq * b, d).astype(wdt), e_wih,
                  preferred_element_type=jnp.float32) + e_b)
    gx = gx.astype(jnp.bfloat16).reshape(seq, b, 4 * d)

    h = jnp.zeros((b, d), jnp.float32)
    c = jnp.zeros((b, d), jnp.float32)
    for t in range(seq):
        gates = gx[t].astype(jnp.float32) + jnp.dot(
            h.astype(wdt), e_whh, preferred_element_type=jnp.float32)
        h, c = _gate_update(gates, c)

    c = jnp.zeros((b, d), jnp.float32)
    outs = []
    for s in range(future_step):
        w = d_whh if (s == 0 or args.zero_input) else d_sum
        gates = d_b + jnp.dot(h.astype(wdt), w,
                              preferred_element_type=jnp.float32)
        h, c = _gate_update(gates, c)
        h = _apply_last_activation(h, args.last_activation)
        outs.append(h)
    return jnp.stack(outs).reshape(seq, b, hh, ww)


if __name__ == "__main__":
    # Small, semantically-consistent shapes: D = H*W, future_step == seq.
    SEQ, BATCH, H, W = 4, 2, 16, 16
    D = H * W
    FUTURE = SEQ

    key = jax.random.PRNGKey(0)
    k_x, k_p = jax.random.split(key)
    x = jax.random.normal(k_x, (SEQ, BATCH, H, W), jnp.float32)
    params = init_fc_lstm_params(k_p, D)

    configs = [
        SimpleNamespace(last_activation="sigmoid", zero_input=True),
        SimpleNamespace(last_activation="tanh", zero_input=False),
    ]
    for args in configs:
        ref = jax.block_until_ready(
            fc_lstm_reference(x, params, args, future_step=FUTURE))
        # Test both execution paths; the grid path is forced with 2 tiles per
        # gate so the gate-axis tiling logic is exercised at the test size.
        for path, kpg in (("small", None), ("grid", 2)):
            out = jax.block_until_ready(fc_lstm_forward(
                x, params, args, future_step=FUTURE,
                force_path=path, gate_tiles_per_gate=kpg))
            assert out.shape == (SEQ, BATCH, H, W)
            err = float(jnp.max(jnp.abs(out - ref)))
            assert jnp.allclose(out, ref, atol=2e-3, rtol=2e-3), (
                f"mismatch for {args} / {path}: max abs err {err}")

    print("KERNEL_OK")
</pallas_src>

<mosaic_0001>
module attributes {stable_mosaic.version = 11 : i64} {
  func.func @kernel(%arg0: i32, %arg1: memref<4x8x1024xbf16, #tpu.memory_space<vmem>>, %arg2: memref<256x1024xbf16, #tpu.memory_space<vmem>>, %arg3: memref<1x256x1024xbf16, #tpu.memory_space<vmem>>, %arg4: memref<1x1024xf32, #tpu.memory_space<vmem>>, %arg5: memref<4x8x256xf32, #tpu.memory_space<vmem>>, %arg6: memref<8x256xf32, #tpu.memory_space<vmem>>, %arg7: memref<8x256xf32, #tpu.memory_space<vmem>>) attributes {dimension_semantics = [#tpu.dimension_semantics<arbitrary>], iteration_bounds = array<i64: 1>, scalar_prefetch = 0 : i64, scratch_operands = 2 : i64, tpu.core_type = #tpu.core_type<tc>, window_params = [{pipeline_mode = #tpu.pipeline_mode<synchronous>, transform_indices = @transform_0, window_bounds = array<i64: 4, 8, 1024>}, {pipeline_mode = #tpu.pipeline_mode<synchronous>, transform_indices = @transform_1, window_bounds = array<i64: 256, 1024>}, {pipeline_mode = #tpu.pipeline_mode<synchronous>, transform_indices = @transform_2, window_bounds = array<i64: 1, 256, 1024>}, {pipeline_mode = #tpu.pipeline_mode<synchronous>, transform_indices = @transform_3, window_bounds = array<i64: 1, 1024>}, {pipeline_mode = #tpu.pipeline_mode<synchronous>, transform_indices = @transform_4, window_bounds = array<i64: 4, 8, 256>}]} {
    %cst = arith.constant 0.000000e+00 : f32
    %0 = vector.broadcast %cst : f32 to vector<8x256xf32>
    %c0 = arith.constant 0 : index
    %c0_0 = arith.constant 0 : index
    %1 = vector.load %arg6[%c0, %c0_0] : memref<8x256xf32, #tpu.memory_space<vmem>>, vector<8x256xf32>
    tpu.vector_store %arg6[%c0, %c0_0], %0 {strides = array<i32>} : memref<8x256xf32, #tpu.memory_space<vmem>>, vector<8x256xf32>,
    %cst_1 = arith.constant 0.000000e+00 : f32
    %2 = vector.broadcast %cst_1 : f32 to vector<8x256xf32>
    %c0_2 = arith.constant 0 : index
    %c0_3 = arith.constant 0 : index
    %3 = vector.load %arg7[%c0_2, %c0_3] : memref<8x256xf32, #tpu.memory_space<vmem>>, vector<8x256xf32>
    tpu.vector_store %arg7[%c0_2, %c0_3], %2 {strides = array<i32>} : memref<8x256xf32, #tpu.memory_space<vmem>>, vector<8x256xf32>,
    %c0_i32 = arith.constant 0 : i32
    %c4_i32 = arith.constant 4 : i32
    %4 = arith.addi %c0_i32, %c4_i32 : i32
    %c1_i32 = arith.constant 1 : i32
    scf.for %arg8 = %c0_i32 to %4 step %c1_i32  : i32 {
      %52 = arith.index_cast %arg8 : i32 to index
      %c0_32 = arith.constant 0 : index
      %c0_33 = arith.constant 0 : index
      %53 = vector.load %arg1[%52, %c0_32, %c0_33] : memref<4x8x1024xbf16, #tpu.memory_space<vmem>>, vector<1x8x1024xbf16>
      %54 = vector.shape_cast %53 : vector<1x8x1024xbf16> to vector<8x1024xbf16>
      %55 = arith.extf %54 : vector<8x1024xbf16> to vector<8x1024xf32>
      %c0_34 = arith.constant 0 : index
      %c0_35 = arith.constant 0 : index
      %56 = vector.load %arg6[%c0_34, %c0_35] : memref<8x256xf32, #tpu.memory_space<vmem>>, vector<8x256xf32>
      %57 = arith.truncf %56 : vector<8x256xf32> to vector<8x256xbf16>
      %c0_36 = arith.constant 0 : index
      %c0_37 = arith.constant 0 : index
      %58 = vector.load %arg2[%c0_36, %c0_37] : memref<256x1024xbf16, #tpu.memory_space<vmem>>, vector<256x1024xbf16>
      %cst_38 = arith.constant dense<0.000000e+00> : vector<8x1024xf32>
      %59 = tpu.matmul %57, %58, %cst_38 {dimension_numbers = #tpu.dot_dimension_numbers<[1], [0], [0], [1], [0, 0, 1, 1], [], []>} : vector<8x256xbf16>, vector<256x1024xbf16>, vector<8x1024xf32> -> vector<8x1024xf32>
      %60 = arith.addf %55, %59 : vector<8x1024xf32>
      %c0_39 = arith.constant 0 : index
      %c0_40 = arith.constant 0 : index
      %61 = vector.load %arg7[%c0_39, %c0_40] : memref<8x256xf32, #tpu.memory_space<vmem>>, vector<8x256xf32>
      %62 = vector.extract_strided_slice %60 {offsets = [0, 0], sizes = [8, 256], strides = [1, 1]} : vector<8x1024xf32> to vector<8x256xf32>
      %63 = arith.negf %62 : vector<8x256xf32>
      %64 = math.exp %63 : vector<8x256xf32>
      %cst_41 = arith.constant 1.000000e+00 : f32
      %65 = vector.broadcast %cst_41 : f32 to vector<8x256xf32>
      %66 = arith.addf %65, %64 : vector<8x256xf32>
      %67 = arith.divf %65, %66 : vector<8x256xf32>
      %68 = vector.extract_strided_slice %60 {offsets = [0, 256], sizes = [8, 256], strides = [1, 1]} : vector<8x1024xf32> to vector<8x256xf32>
      %69 = arith.negf %68 : vector<8x256xf32>
      %70 = math.exp %69 : vector<8x256xf32>
      %cst_42 = arith.constant 1.000000e+00 : f32
      %71 = vector.broadcast %cst_42 : f32 to vector<8x256xf32>
      %72 = arith.addf %71, %70 : vector<8x256xf32>
      %73 = arith.divf %71, %72 : vector<8x256xf32>
      %74 = vector.extract_strided_slice %60 {offsets = [0, 512], sizes = [8, 256], strides = [1, 1]} : vector<8x1024xf32> to vector<8x256xf32>
      %75 = math.tanh %74 : vector<8x256xf32>
      %76 = vector.extract_strided_slice %60 {offsets = [0, 768], sizes = [8, 256], strides = [1, 1]} : vector<8x1024xf32> to vector<8x256xf32>
      %77 = arith.negf %76 : vector<8x256xf32>
      %78 = math.exp %77 : vector<8x256xf32>
      %cst_43 = arith.constant 1.000000e+00 : f32
      %79 = vector.broadcast %cst_43 : f32 to vector<8x256xf32>
      %80 = arith.addf %79, %78 : vector<8x256xf32>
      %81 = arith.divf %79, %80 : vector<8x256xf32>
      %82 = arith.mulf %73, %61 : vector<8x256xf32>
      %83 = arith.mulf %67, %75 : vector<8x256xf32>
      %84 = arith.addf %82, %83 : vector<8x256xf32>
      %85 = math.tanh %84 : vector<8x256xf32>
      %86 = arith.mulf %81, %85 : vector<8x256xf32>
      %c0_44 = arith.constant 0 : index
      %c0_45 = arith.constant 0 : index
      %87 = vector.load %arg6[%c0_44, %c0_45] : memref<8x256xf32, #tpu.memory_space<vmem>>, vector<8x256xf32>
      tpu.vector_store %arg6[%c0_44, %c0_45], %86 {strides = array<i32>} : memref<8x256xf32, #tpu.memory_space<vmem>>, vector<8x256xf32>,
      %c0_46 = arith.constant 0 : index
      %c0_47 = arith.constant 0 : index
      %88 = vector.load %arg7[%c0_46, %c0_47] : memref<8x256xf32, #tpu.memory_space<vmem>>, vector<8x256xf32>
      tpu.vector_store %arg7[%c0_46, %c0_47], %84 {strides = array<i32>} : memref<8x256xf32, #tpu.memory_space<vmem>>, vector<8x256xf32>,
    }
    %c4_i32_4 = arith.constant 4 : i32
    %cst_5 = arith.constant 0.000000e+00 : f32
    %5 = vector.broadcast %cst_5 : f32 to vector<8x256xf32>
    %c0_6 = arith.constant 0 : index
    %c0_7 = arith.constant 0 : index
    %6 = vector.load %arg7[%c0_6, %c0_7] : memref<8x256xf32, #tpu.memory_space<vmem>>, vector<8x256xf32>
    tpu.vector_store %arg7[%c0_6, %c0_7], %5 {strides = array<i32>} : memref<8x256xf32, #tpu.memory_space<vmem>>, vector<8x256xf32>,
    %c0_8 = arith.constant 0 : index
    %c0_9 = arith.constant 0 : index
    %7 = vector.load %arg4[%c0_8, %c0_9] : memref<1x1024xf32, #tpu.memory_space<vmem>>, vector<1x1024xf32>
    %c0_10 = arith.constant 0 : index
    %c0_11 = arith.constant 0 : index
    %8 = vector.load %arg6[%c0_10, %c0_11] : memref<8x256xf32, #tpu.memory_space<vmem>>, vector<8x256xf32>
    %9 = arith.truncf %8 : vector<8x256xf32> to vector<8x256xbf16>
    %c0_12 = arith.constant 0 : index
    %c0_13 = arith.constant 0 : index
    %c0_14 = arith.constant 0 : index
    %10 = vector.load %arg3[%c0_12, %c0_13, %c0_14] : memref<1x256x1024xbf16, #tpu.memory_space<vmem>>, vector<1x256x1024xbf16>
    %11 = vector.shape_cast %10 : vector<1x256x1024xbf16> to vector<256x1024xbf16>
    %cst_15 = arith.constant dense<0.000000e+00> : vector<8x1024xf32>
    %12 = tpu.matmul %9, %11, %cst_15 {dimension_numbers = #tpu.dot_dimension_numbers<[1], [0], [0], [1], [0, 0, 1, 1], [], []>} : vector<8x256xbf16>, vector<256x1024xbf16>, vector<8x1024xf32> -> vector<8x1024xf32>
    %13 = vector.broadcast %7 : vector<1x1024xf32> to vector<8x1024xf32>
    %14 = arith.addf %13, %12 : vector<8x1024xf32>
    %c0_16 = arith.constant 0 : index
    %c0_17 = arith.constant 0 : index
    %15 = vector.load %arg7[%c0_16, %c0_17] : memref<8x256xf32, #tpu.memory_space<vmem>>, vector<8x256xf32>
    %16 = vector.extract_strided_slice %14 {offsets = [0, 0], sizes = [8, 256], strides = [1, 1]} : vector<8x1024xf32> to vector<8x256xf32>
    %17 = arith.negf %16 : vector<8x256xf32>
    %18 = math.exp %17 : vector<8x256xf32>
    %cst_18 = arith.constant 1.000000e+00 : f32
    %19 = vector.broadcast %cst_18 : f32 to vector<8x256xf32>
    %20 = arith.addf %19, %18 : vector<8x256xf32>
    %21 = arith.divf %19, %20 : vector<8x256xf32>
    %22 = vector.extract_strided_slice %14 {offsets = [0, 256], sizes = [8, 256], strides = [1, 1]} : vector<8x1024xf32> to vector<8x256xf32>
    %23 = arith.negf %22 : vector<8x256xf32>
    %24 = math.exp %23 : vector<8x256xf32>
    %cst_19 = arith.constant 1.000000e+00 : f32
    %25 = vector.broadcast %cst_19 : f32 to vector<8x256xf32>
    %26 = arith.addf %25, %24 : vector<8x256xf32>
    %27 = arith.divf %25, %26 : vector<8x256xf32>
    %28 = vector.extract_strided_slice %14 {offsets = [0, 512], sizes = [8, 256], strides = [1, 1]} : vector<8x1024xf32> to vector<8x256xf32>
    %29 = math.tanh %28 : vector<8x256xf32>
    %30 = vector.extract_strided_slice %14 {offsets = [0, 768], sizes = [8, 256], strides = [1, 1]} : vector<8x1024xf32> to vector<8x256xf32>
    %31 = arith.negf %30 : vector<8x256xf32>
    %32 = math.exp %31 : vector<8x256xf32>
    %cst_20 = arith.constant 1.000000e+00 : f32
    %33 = vector.broadcast %cst_20 : f32 to vector<8x256xf32>
    %34 = arith.addf %33, %32 : vector<8x256xf32>
    %35 = arith.divf %33, %34 : vector<8x256xf32>
    %36 = arith.mulf %27, %15 : vector<8x256xf32>
    %37 = arith.mulf %21, %29 : vector<8x256xf32>
    %38 = arith.addf %36, %37 : vector<8x256xf32>
    %39 = math.tanh %38 : vector<8x256xf32>
    %40 = arith.mulf %35, %39 : vector<8x256xf32>
    %41 = arith.negf %40 : vector<8x256xf32>
    %42 = math.exp %41 : vector<8x256xf32>
    %cst_21 = arith.constant 1.000000e+00 : f32
    %43 = vector.broadcast %cst_21 : f32 to vector<8x256xf32>
    %44 = arith.addf %43, %42 : vector<8x256xf32>
    %45 = arith.divf %43, %44 : vector<8x256xf32>
    %c0_22 = arith.constant 0 : index
    %c0_23 = arith.constant 0 : index
    %46 = vector.load %arg6[%c0_22, %c0_23] : memref<8x256xf32, #tpu.memory_space<vmem>>, vector<8x256xf32>
    tpu.vector_store %arg6[%c0_22, %c0_23], %45 {strides = array<i32>} : memref<8x256xf32, #tpu.memory_space<vmem>>, vector<8x256xf32>,
    %c0_24 = arith.constant 0 : index
    %c0_25 = arith.constant 0 : index
    %47 = vector.load %arg7[%c0_24, %c0_25] : memref<8x256xf32, #tpu.memory_space<vmem>>, vector<8x256xf32>
    tpu.vector_store %arg7[%c0_24, %c0_25], %38 {strides = array<i32>} : memref<8x256xf32, #tpu.memory_space<vmem>>, vector<8x256xf32>,
    %c0_26 = arith.constant 0 : index
    %c0_27 = arith.constant 0 : index
    %c0_28 = arith.constant 0 : index
    %48 = vector.load %arg5[%c0_26, %c0_27, %c0_28] : memref<4x8x256xf32, #tpu.memory_space<vmem>>, vector<1x8x256xf32>
    %49 = vector.shape_cast %48 : vector<1x8x256xf32> to vector<8x256xf32>
    %50 = vector.shape_cast %45 : vector<8x256xf32> to vector<1x8x256xf32>
    tpu.vector_store %arg5[%c0_26, %c0_27, %c0_28], %50 {strides = array<i32>} : memref<4x8x256xf32, #tpu.memory_space<vmem>>, vector<1x8x256xf32>,
    %c1_i32_29 = arith.constant 1 : i32
    %c3_i32 = arith.constant 3 : i32
    %51 = arith.addi %c1_i32_29, %c3_i32 : i32
    %c1_i32_30 = arith.constant 1 : i32
    scf.for %arg8 = %c1_i32_29 to %51 step %c1_i32_30  : i32 {
      %c0_32 = arith.constant 0 : index
      %c0_33 = arith.constant 0 : index
      %52 = vector.load %arg4[%c0_32, %c0_33] : memref<1x1024xf32, #tpu.memory_space<vmem>>, vector<1x1024xf32>
      %c0_34 = arith.constant 0 : index
      %c0_35 = arith.constant 0 : index
      %53 = vector.load %arg6[%c0_34, %c0_35] : memref<8x256xf32, #tpu.memory_space<vmem>>, vector<8x256xf32>
      %54 = arith.truncf %53 : vector<8x256xf32> to vector<8x256xbf16>
      %c0_36 = arith.constant 0 : index
      %c0_37 = arith.constant 0 : index
      %c0_38 = arith.constant 0 : index
      %55 = vector.load %arg3[%c0_36, %c0_37, %c0_38] : memref<1x256x1024xbf16, #tpu.memory_space<vmem>>, vector<1x256x1024xbf16>
      %56 = vector.shape_cast %55 : vector<1x256x1024xbf16> to vector<256x1024xbf16>
      %cst_39 = arith.constant dense<0.000000e+00> : vector<8x1024xf32>
      %57 = tpu.matmul %54, %56, %cst_39 {dimension_numbers = #tpu.dot_dimension_numbers<[1], [0], [0], [1], [0, 0, 1, 1], [], []>} : vector<8x256xbf16>, vector<256x1024xbf16>, vector<8x1024xf32> -> vector<8x1024xf32>
      %58 = vector.broadcast %52 : vector<1x1024xf32> to vector<8x1024xf32>
      %59 = arith.addf %58, %57 : vector<8x1024xf32>
      %c0_40 = arith.constant 0 : index
      %c0_41 = arith.constant 0 : index
      %60 = vector.load %arg7[%c0_40, %c0_41] : memref<8x256xf32, #tpu.memory_space<vmem>>, vector<8x256xf32>
      %61 = vector.extract_strided_slice %59 {offsets = [0, 0], sizes = [8, 256], strides = [1, 1]} : vector<8x1024xf32> to vector<8x256xf32>
      %62 = arith.negf %61 : vector<8x256xf32>
      %63 = math.exp %62 : vector<8x256xf32>
      %cst_42 = arith.constant 1.000000e+00 : f32
      %64 = vector.broadcast %cst_42 : f32 to vector<8x256xf32>
      %65 = arith.addf %64, %63 : vector<8x256xf32>
      %66 = arith.divf %64, %65 : vector<8x256xf32>
      %67 = vector.extract_strided_slice %59 {offsets = [0, 256], sizes = [8, 256], strides = [1, 1]} : vector<8x1024xf32> to vector<8x256xf32>
      %68 = arith.negf %67 : vector<8x256xf32>
      %69 = math.exp %68 : vector<8x256xf32>
      %cst_43 = arith.constant 1.000000e+00 : f32
      %70 = vector.broadcast %cst_43 : f32 to vector<8x256xf32>
      %71 = arith.addf %70, %69 : vector<8x256xf32>
      %72 = arith.divf %70, %71 : vector<8x256xf32>
      %73 = vector.extract_strided_slice %59 {offsets = [0, 512], sizes = [8, 256], strides = [1, 1]} : vector<8x1024xf32> to vector<8x256xf32>
      %74 = math.tanh %73 : vector<8x256xf32>
      %75 = vector.extract_strided_slice %59 {offsets = [0, 768], sizes = [8, 256], strides = [1, 1]} : vector<8x1024xf32> to vector<8x256xf32>
      %76 = arith.negf %75 : vector<8x256xf32>
      %77 = math.exp %76 : vector<8x256xf32>
      %cst_44 = arith.constant 1.000000e+00 : f32
      %78 = vector.broadcast %cst_44 : f32 to vector<8x256xf32>
      %79 = arith.addf %78, %77 : vector<8x256xf32>
      %80 = arith.divf %78, %79 : vector<8x256xf32>
      %81 = arith.mulf %72, %60 : vector<8x256xf32>
      %82 = arith.mulf %66, %74 : vector<8x256xf32>
      %83 = arith.addf %81, %82 : vector<8x256xf32>
      %84 = math.tanh %83 : vector<8x256xf32>
      %85 = arith.mulf %80, %84 : vector<8x256xf32>
      %86 = arith.negf %85 : vector<8x256xf32>
      %87 = math.exp %86 : vector<8x256xf32>
      %cst_45 = arith.constant 1.000000e+00 : f32
      %88 = vector.broadcast %cst_45 : f32 to vector<8x256xf32>
      %89 = arith.addf %88, %87 : vector<8x256xf32>
      %90 = arith.divf %88, %89 : vector<8x256xf32>
      %c0_46 = arith.constant 0 : index
      %c0_47 = arith.constant 0 : index
      %91 = vector.load %arg6[%c0_46, %c0_47] : memref<8x256xf32, #tpu.memory_space<vmem>>, vector<8x256xf32>
      tpu.vector_store %arg6[%c0_46, %c0_47], %90 {strides = array<i32>} : memref<8x256xf32, #tpu.memory_space<vmem>>, vector<8x256xf32>,
      %c0_48 = arith.constant 0 : index
      %c0_49 = arith.constant 0 : index
      %92 = vector.load %arg7[%c0_48, %c0_49] : memref<8x256xf32, #tpu.memory_space<vmem>>, vector<8x256xf32>
      tpu.vector_store %arg7[%c0_48, %c0_49], %83 {strides = array<i32>} : memref<8x256xf32, #tpu.memory_space<vmem>>, vector<8x256xf32>,
      %93 = arith.index_cast %arg8 : i32 to index
      %c0_50 = arith.constant 0 : index
      %c0_51 = arith.constant 0 : index
      %94 = vector.load %arg5[%93, %c0_50, %c0_51] : memref<4x8x256xf32, #tpu.memory_space<vmem>>, vector<1x8x256xf32>
      %95 = vector.shape_cast %94 : vector<1x8x256xf32> to vector<8x256xf32>
      %96 = vector.shape_cast %90 : vector<8x256xf32> to vector<1x8x256xf32>
      tpu.vector_store %arg5[%93, %c0_50, %c0_51], %96 {strides = array<i32>} : memref<4x8x256xf32, #tpu.memory_space<vmem>>, vector<1x8x256xf32>,
    }
    %c3_i32_31 = arith.constant 3 : i32
    return
  }
  func.func @transform_0(%arg0: i32) -> (i32, i32, i32) {
    %c0_i32 = arith.constant 0 : i32
    %c0_i32_0 = arith.constant 0 : i32
    %c0_i32_1 = arith.constant 0 : i32
    %c0_i32_2 = arith.constant 0 : i32
    return %c0_i32, %c0_i32_0, %c0_i32_1 : i32, i32, i32
  }
  func.func @transform_1(%arg0: i32) -> (i32, i32) {
    %c0_i32 = arith.constant 0 : i32
    %c0_i32_0 = arith.constant 0 : i32
    %c0_i32_1 = arith.constant 0 : i32
    return %c0_i32, %c0_i32_0 : i32, i32
  }
  func.func @transform_2(%arg0: i32) -> (i32, i32, i32) {
    %c0_i32 = arith.constant 0 : i32
    %c0_i32_0 = arith.constant 0 : i32
    %c0_i32_1 = arith.constant 0 : i32
    %c0_i32_2 = arith.constant 0 : i32
    return %c0_i32, %c0_i32_0, %c0_i32_1 : i32, i32, i32
  }
  func.func @transform_3(%arg0: i32) -> (i32, i32) {
    %c0_i32 = arith.constant 0 : i32
    %c0_i32_0 = arith.constant 0 : i32
    %c0_i32_1 = arith.constant 0 : i32
    return %c0_i32, %c0_i32_0 : i32, i32
  }
  func.func @transform_4(%arg0: i32) -> (i32, i32, i32) {
    %c0_i32 = arith.constant 0 : i32
    %c0_i32_0 = arith.constant 0 : i32
    %c0_i32_1 = arith.constant 0 : i32
    %c0_i32_2 = arith.constant 0 : i32
    return %c0_i32, %c0_i32_0, %c0_i32_1 : i32, i32, i32
  }
}

</mosaic_0001>

<llo_original>
// kernel: tpu_custom_call.1
$region0: #{tpu_custom_call.1}
  #allocation0 [shape = 'u32[]', space=smem, size = 0x4, offset = 0x4, fixed_abs, tag = 'smem constant byte address 0x4 - core index']
  #allocation1 [shape = 'u32[144,128]{1,0:T(1,128)}', space=vmem, size = 0x12000, scoped, tag = 'internal scratch']
  #allocation2 [shape = 'f32[8,256]{1,0:T(8,128)}', space=vmem, size = 0x2000, scoped, tag = 'scratch operand']
  #allocation3 [shape = 'f32[8,256]{1,0:T(8,128)}', space=vmem, size = 0x2000, scoped, tag = 'scratch operand']
  %s0 = inlined_call_operand.hbm [shape: bf16[4,8,1024], index: 0, kind: input, shape index: {}]
  %s1 = inlined_call_operand.hbm [shape: bf16[256,1024], index: 1, kind: input, shape index: {}]
  %s2 = inlined_call_operand.hbm [shape: bf16[1,256,1024], index: 2, kind: input, shape index: {}]
  %s3 = inlined_call_operand.hbm [shape: f32[1,1024], index: 3, kind: input, shape index: {}]
  %s4 = inlined_call_operand.hbm [shape: f32[4,8,256], index: 4, kind: output, shape index: {}]
  %s5 = sld [smem:[#allocation0]]
  $region56: #{tpu_custom_call.1} parent=0
    _
  %s7 = ssub.s32 1, %s5
  %s8 = scalar_select 0, %s7, %s5
  $region1: #{tpu_custom_call.1} parent=0
    #allocation4 [shape = 'u8[65536]{0}', space=vmem, size = 0x10000, scoped, tag = 'input window, operand 0, single buffered']
    #allocation5 [shape = 's32[1]{0}', space=sflag, size = 0x4, scoped, tag = 'scoped memory for tpu_custom_call.1']
    #allocation6 [shape = 's32[1]{0}', space=sflag, size = 0x4, scoped, tag = 'scoped memory for tpu_custom_call.1']
    #allocation7 [shape = 'u8[524288]{0}', space=vmem, size = 0x80000, scoped, tag = 'input window, operand 1, single buffered']
    #allocation8 [shape = 's32[1]{0}', space=sflag, size = 0x4, scoped, tag = 'scoped memory for tpu_custom_call.1']
    #allocation9 [shape = 'u8[524288]{0}', space=vmem, size = 0x80000, scoped, tag = 'input window, operand 2, single buffered']
    #allocation10 [shape = 'u8[4096]{0}', space=vmem, size = 0x1000, scoped, tag = 'input window, operand 3, single buffered']
    #allocation11 [shape = 's32[1]{0}', space=sflag, size = 0x4, scoped, tag = 'scoped memory for tpu_custom_call.1']
    #allocation12 [shape = 'u8[32768]{0}', space=vmem, size = 0x8000, scoped, tag = 'output window, operand 0, single buffered']
    %9 = vsyncpa [#allocation5], 0
    %10 = vsyncpa [#allocation8], 0
    %11 = vsyncpa [#allocation11], 0
    %12 = vsyncpa [#allocation6], 0
    // Predicated region
    $region2: #{tpu_custom_call.1} parent=1 // pred_check
      _
    $region3: #{tpu_custom_call.1} parent=1 // pred_check_branch
      %14 = sbr.rel (0) target = $region5
    $region4: #{tpu_custom_call.1} parent=1 // pred_region
      %s16 = ssub.s32 2048, 2048
      %17 = vsyncadd [#allocation5], %s16
      %s18 = sshll.u32 [#allocation4], 4
      %s19 = int_to_ptr.vmem [resolvable:$true] %s18
      %24 = dma.hbm_to_vmem [thread:$0]  %s0, 2048, %s19, [#allocation5], 512, 512, 32
    $region5: #{tpu_custom_call.1} parent=1 // pred_fallthru
      _
    // Predicated region
    $region6: #{tpu_custom_call.1} parent=1 // pred_check
      _
    $region7: #{tpu_custom_call.1} parent=1 // pred_check_branch
      %26 = sbr.rel (0) target = $region9
    $region8: #{tpu_custom_call.1} parent=1 // pred_region
      %s28 = ssub.s32 16384, 16384
      %29 = vsyncadd [#allocation8], %s28
      %s30 = sshll.u32 [#allocation7], 4
      %s31 = int_to_ptr.vmem [resolvable:$true] %s30
      %36 = dma.hbm_to_vmem [thread:$0]  %s1, 16384, %s31, [#allocation8], 512, 512, 32
    $region9: #{tpu_custom_call.1} parent=1 // pred_fallthru
      _
    // Predicated region
    $region10: #{tpu_custom_call.1} parent=1 // pred_check
      _
    $region11: #{tpu_custom_call.1} parent=1 // pred_check_branch
      %38 = sbr.rel (0) target = $region13
    $region12: #{tpu_custom_call.1} parent=1 // pred_region
      %s40 = ssub.s32 16384, 16384
      %41 = vsyncadd [#allocation8], %s40
      %s42 = sshll.u32 [#allocation9], 4
      %s43 = int_to_ptr.vmem [resolvable:$true] %s42
      %48 = dma.hbm_to_vmem [thread:$0]  %s2, 16384, %s43, [#allocation8], 512, 512, 32
    $region13: #{tpu_custom_call.1} parent=1 // pred_fallthru
      _
    // Predicated region
    $region14: #{tpu_custom_call.1} parent=1 // pred_check
      _
    $region15: #{tpu_custom_call.1} parent=1 // pred_check_branch
      %50 = sbr.rel (0) target = $region17
    $region16: #{tpu_custom_call.1} parent=1 // pred_region
      %s52 = ssub.s32 128, 128
      %53 = vsyncadd [#allocation11], %s52
      %s55 = sshll.u32 [#allocation10], 4
      %s56 = int_to_ptr.vmem [resolvable:$true] %s55
      %58 = dma.hbm_to_vmem [thread:$0]  %s3, 128, %s56, [#allocation11]
    $region17: #{tpu_custom_call.1} parent=1 // pred_fallthru
      _
    // Predicated region
    $region18: #{tpu_custom_call.1} parent=1 // pred_check
      _
    $region19: #{tpu_custom_call.1} parent=1 // pred_check_branch
      %60 = sbr.rel (0) target = $region21
    $region20: #{tpu_custom_call.1} parent=1 // pred_region
      %61 = dma.done [#allocation5], 2048
    $region21: #{tpu_custom_call.1} parent=1 // pred_fallthru
      _
    // Predicated region
    $region22: #{tpu_custom_call.1} parent=1 // pred_check
      _
    $region23: #{tpu_custom_call.1} parent=1 // pred_check_branch
      %63 = sbr.rel (0) target = $region25
    $region24: #{tpu_custom_call.1} parent=1 // pred_region
      %64 = dma.done [#allocation8], 16384
    $region25: #{tpu_custom_call.1} parent=1 // pred_fallthru
      _
    // Predicated region
    $region26: #{tpu_custom_call.1} parent=1 // pred_check
      _
    $region27: #{tpu_custom_call.1} parent=1 // pred_check_branch
      %66 = sbr.rel (0) target = $region29
    $region28: #{tpu_custom_call.1} parent=1 // pred_region
      %67 = dma.done [#allocation8], 16384
    $region29: #{tpu_custom_call.1} parent=1 // pred_fallthru
      _
    // Predicated region
    $region30: #{tpu_custom_call.1} parent=1 // pred_check
      _
    $region31: #{tpu_custom_call.1} parent=1 // pred_check_branch
      %69 = sbr.rel (0) target = $region33
    $region32: #{tpu_custom_call.1} parent=1 // pred_region
      %70 = dma.done [#allocation11], 128
    $region33: #{tpu_custom_call.1} parent=1 // pred_fallthru
      _
    %71 = vst [vmem:[#allocation2] sm:$0xff] 0.0
    %72 = vst [vmem:[#allocation2 + $0x8] sm:$0xff] 0.0
    %73 = vst [vmem:[#allocation3] sm:$0xff] 0.0
    %74 = vst [vmem:[#allocation3 + $0x8] sm:$0xff] 0.0
    loop: start=0, step=1, limit=4
    $region34: #{tpu_custom_call.1} parent=1 // loop_pre_header
      _
    $region35: #{tpu_custom_call.1} parent=1 // loop_header
      %s76 = sphi 0, %s80
      %p77 = scmp.ge.s32.totalorder %s76, 4
    $region36: #{tpu_custom_call.1} parent=1 // loop_header_branch
      %79 = sbr.rel (%p77) target = $region40
    $region37: #{tpu_custom_call.1} parent=1 // loop_body
      %s81 = smul.u32 %s76, 8
      %s82 = smul.addr %s81, 4
      %s83 = scalar_lea.vmem [#allocation4], %s82
      %v84 = vld [vmem:[%s83] sm:$0xff]
      %v85 = vld [vmem:[%s83 + $0x8] sm:$0xff]
      %v86 = vld [vmem:[%s83 + $0x10] sm:$0xff]
      %v87 = vld [vmem:[%s83 + $0x18] sm:$0xff]
      %v88 = vunpack.c.l.bf16 %v84
      %v89 = vunpack.c.h.bf16 %v84
      %v90 = vunpack.c.l.bf16 %v85
      %v91 = vunpack.c.h.bf16 %v85
      %v92 = vunpack.c.l.bf16 %v86
      %v93 = vunpack.c.h.bf16 %v86
      %v94 = vunpack.c.l.bf16 %v87
      %v95 = vunpack.c.h.bf16 %v87
      %v96 = vld [vmem:[#allocation2] sm:$0xff]
      %v97 = vld [vmem:[#allocation2 + $0x8] sm:$0xff]
      %v98 = vpack.c.bf16 %v96, %v96
      %v99 = vpack.c.bf16 %v97, %v97
      %v100 = vld [vmem:[#allocation7] sm:$0xff]
      %v101 = vld [vmem:[#allocation7 + $0x8] sm:$0xff]
      %v102 = vld [vmem:[#allocation7 + $0x10] sm:$0xff]
      %v103 = vld [vmem:[#allocation7 + $0x18] sm:$0xff]
      %v104 = vld [vmem:[#allocation7 + $0x20] sm:$0xff]
      %v105 = vld [vmem:[#allocation7 + $0x28] sm:$0xff]
      %v106 = vld [vmem:[#allocation7 + $0x30] sm:$0xff]
      %v107 = vld [vmem:[#allocation7 + $0x38] sm:$0xff]
      %v108 = vld [vmem:[#allocation7 + $0x40] sm:$0xff]
      %v109 = vld [vmem:[#allocation7 + $0x48] sm:$0xff]
      %v110 = vld [vmem:[#allocation7 + $0x50] sm:$0xff]
      %v111 = vld [vmem:[#allocation7 + $0x58] sm:$0xff]
      %v112 = vld [vmem:[#allocation7 + $0x60] sm:$0xff]
      %v113 = vld [vmem:[#allocation7 + $0x68] sm:$0xff]
      %v114 = vld [vmem:[#allocation7 + $0x70] sm:$0xff]
      %v115 = vld [vmem:[#allocation7 + $0x78] sm:$0xff]
      %v116 = vld [vmem:[#allocation7 + $0x80] sm:$0xff]
      %v117 = vld [vmem:[#allocation7 + $0x88] sm:$0xff]
      %v118 = vld [vmem:[#allocation7 + $0x90] sm:$0xff]
      %v119 = vld [vmem:[#allocation7 + $0x98] sm:$0xff]
      %v120 = vld [vmem:[#allocation7 + $0xa0] sm:$0xff]
      %v121 = vld [vmem:[#allocation7 + $0xa8] sm:$0xff]
      %v122 = vld [vmem:[#allocation7 + $0xb0] sm:$0xff]
      %v123 = vld [vmem:[#allocation7 + $0xb8] sm:$0xff]
      %v124 = vld [vmem:[#allocation7 + $0xc0] sm:$0xff]
      %v125 = vld [vmem:[#allocation7 + $0xc8] sm:$0xff]
      %v126 = vld [vmem:[#allocation7 + $0xd0] sm:$0xff]
      %v127 = vld [vmem:[#allocation7 + $0xd8] sm:$0xff]
      %v128 = vld [vmem:[#allocation7 + $0xe0] sm:$0xff]
      %v129 = vld [vmem:[#allocation7 + $0xe8] sm:$0xff]
      %v130 = vld [vmem:[#allocation7 + $0xf0] sm:$0xff]
      %v131 = vld [vmem:[#allocation7 + $0xf8] sm:$0xff]
      %v132 = vld [vmem:[#allocation7 + $0x100] sm:$0xff]
      %v133 = vld [vmem:[#allocation7 + $0x108] sm:$0xff]
      %v134 = vld [vmem:[#allocation7 + $0x110] sm:$0xff]
      %v135 = vld [vmem:[#allocation7 + $0x118] sm:$0xff]
      %v136 = vld [vmem:[#allocation7 + $0x120] sm:$0xff]
      %v137 = vld [vmem:[#allocation7 + $0x128] sm:$0xff]
      %v138 = vld [vmem:[#allocation7 + $0x130] sm:$0xff]
      %v139 = vld [vmem:[#allocation7 + $0x138] sm:$0xff]
      %v140 = vld [vmem:[#allocation7 + $0x140] sm:$0xff]
      %v141 = vld [vmem:[#allocation7 + $0x148] sm:$0xff]
      %v142 = vld [vmem:[#allocation7 + $0x150] sm:$0xff]
      %v143 = vld [vmem:[#allocation7 + $0x158] sm:$0xff]
      %v144 = vld [vmem:[#allocation7 + $0x160] sm:$0xff]
      %v145 = vld [vmem:[#allocation7 + $0x168] sm:$0xff]
      %v146 = vld [vmem:[#allocation7 + $0x170] sm:$0xff]
      %v147 = vld [vmem:[#allocation7 + $0x178] sm:$0xff]
      %v148 = vld [vmem:[#allocation7 + $0x180] sm:$0xff]
      %v149 = vld [vmem:[#allocation7 + $0x188] sm:$0xff]
      %v150 = vld [vmem:[#allocation7 + $0x190] sm:$0xff]
      %v151 = vld [vmem:[#allocation7 + $0x198] sm:$0xff]
      %v152 = vld [vmem:[#allocation7 + $0x1a0] sm:$0xff]
      %v153 = vld [vmem:[#allocation7 + $0x1a8] sm:$0xff]
      %v154 = vld [vmem:[#allocation7 + $0x1b0] sm:$0xff]
      %v155 = vld [vmem:[#allocation7 + $0x1b8] sm:$0xff]
      %v156 = vld [vmem:[#allocation7 + $0x1c0] sm:$0xff]
      %v157 = vld [vmem:[#allocation7 + $0x1c8] sm:$0xff]
      %v158 = vld [vmem:[#allocation7 + $0x1d0] sm:$0xff]
      %v159 = vld [vmem:[#allocation7 + $0x1d8] sm:$0xff]
      %v160 = vld [vmem:[#allocation7 + $0x1e0] sm:$0xff]
      %v161 = vld [vmem:[#allocation7 + $0x1e8] sm:$0xff]
      %v162 = vld [vmem:[#allocation7 + $0x1f0] sm:$0xff]
      %v163 = vld [vmem:[#allocation7 + $0x1f8] sm:$0xff]
      %v164 = vld [vmem:[#allocation7 + $0x200] sm:$0xff]
      %v165 = vld [vmem:[#allocation7 + $0x208] sm:$0xff]
      %v166 = vld [vmem:[#allocation7 + $0x210] sm:$0xff]
      %v167 = vld [vmem:[#allocation7 + $0x218] sm:$0xff]
      %v168 = vld [vmem:[#allocation7 + $0x220] sm:$0xff]
      %v169 = vld [vmem:[#allocation7 + $0x228] sm:$0xff]
      %v170 = vld [vmem:[#allocation7 + $0x230] sm:$0xff]
      %v171 = vld [vmem:[#allocation7 + $0x238] sm:$0xff]
      %v172 = vld [vmem:[#allocation7 + $0x240] sm:$0xff]
      %v173 = vld [vmem:[#allocation7 + $0x248] sm:$0xff]
      %v174 = vld [vmem:[#allocation7 + $0x250] sm:$0xff]
      %v175 = vld [vmem:[#allocation7 + $0x258] sm:$0xff]
      %v176 = vld [vmem:[#allocation7 + $0x260] sm:$0xff]
      %v177 = vld [vmem:[#allocation7 + $0x268] sm:$0xff]
      %v178 = vld [vmem:[#allocation7 + $0x270] sm:$0xff]
      %v179 = vld [vmem:[#allocation7 + $0x278] sm:$0xff]
      %v180 = vld [vmem:[#allocation7 + $0x280] sm:$0xff]
      %v181 = vld [vmem:[#allocation7 + $0x288] sm:$0xff]
      %v182 = vld [vmem:[#allocation7 + $0x290] sm:$0xff]
      %v183 = vld [vmem:[#allocation7 + $0x298] sm:$0xff]
      %v184 = vld [vmem:[#allocation7 + $0x2a0] sm:$0xff]
      %v185 = vld [vmem:[#allocation7 + $0x2a8] sm:$0xff]
      %v186 = vld [vmem:[#allocation7 + $0x2b0] sm:$0xff]
      %v187 = vld [vmem:[#allocation7 + $0x2b8] sm:$0xff]
      %v188 = vld [vmem:[#allocation7 + $0x2c0] sm:$0xff]
      %v189 = vld [vmem:[#allocation7 + $0x2c8] sm:$0xff]
      %v190 = vld [vmem:[#allocation7 + $0x2d0] sm:$0xff]
      %v191 = vld [vmem:[#allocation7 + $0x2d8] sm:$0xff]
      %v192 = vld [vmem:[#allocation7 + $0x2e0] sm:$0xff]
      %v193 = vld [vmem:[#allocation7 + $0x2e8] sm:$0xff]
      %v194 = vld [vmem:[#allocation7 + $0x2f0] sm:$0xff]
      %v195 = vld [vmem:[#allocation7 + $0x2f8] sm:$0xff]
      %v196 = vld [vmem:[#allocation7 + $0x300] sm:$0xff]
      %v197 = vld [vmem:[#allocation7 + $0x308] sm:$0xff]
      %v198 = vld [vmem:[#allocation7 + $0x310] sm:$0xff]
      %v199 = vld [vmem:[#allocation7 + $0x318] sm:$0xff]
      %v200 = vld [vmem:[#allocation7 + $0x320] sm:$0xff]
      %v201 = vld [vmem:[#allocation7 + $0x328] sm:$0xff]
      %v202 = vld [vmem:[#allocation7 + $0x330] sm:$0xff]
      %v203 = vld [vmem:[#allocation7 + $0x338] sm:$0xff]
      %v204 = vld [vmem:[#allocation7 + $0x340] sm:$0xff]
      %v205 = vld [vmem:[#allocation7 + $0x348] sm:$0xff]
      %v206 = vld [vmem:[#allocation7 + $0x350] sm:$0xff]
      %v207 = vld [vmem:[#allocation7 + $0x358] sm:$0xff]
      %v208 = vld [vmem:[#allocation7 + $0x360] sm:$0xff]
      %v209 = vld [vmem:[#allocation7 + $0x368] sm:$0xff]
      %v210 = vld [vmem:[#allocation7 + $0x370] sm:$0xff]
      %v211 = vld [vmem:[#allocation7 + $0x378] sm:$0xff]
      %v212 = vld [vmem:[#allocation7 + $0x380] sm:$0xff]
      %v213 = vld [vmem:[#allocation7 + $0x388] sm:$0xff]
      %v214 = vld [vmem:[#allocation7 + $0x390] sm:$0xff]
      %v215 = vld [vmem:[#allocation7 + $0x398] sm:$0xff]
      %v216 = vld [vmem:[#allocation7 + $0x3a0] sm:$0xff]
      %v217 = vld [vmem:[#allocation7 + $0x3a8] sm:$0xff]
      %v218 = vld [vmem:[#allocation7 + $0x3b0] sm:$0xff]
      %v219 = vld [vmem:[#allocation7 + $0x3b8] sm:$0xff]
      %v220 = vld [vmem:[#allocation7 + $0x3c0] sm:$0xff]
      %v221 = vld [vmem:[#allocation7 + $0x3c8] sm:$0xff]
      %v222 = vld [vmem:[#allocation7 + $0x3d0] sm:$0xff]
      %v223 = vld [vmem:[#allocation7 + $0x3d8] sm:$0xff]
      %v224 = vld [vmem:[#allocation7 + $0x3e0] sm:$0xff]
      %v225 = vld [vmem:[#allocation7 + $0x3e8] sm:$0xff]
      %v226 = vld [vmem:[#allocation7 + $0x3f0] sm:$0xff]
      %v227 = vld [vmem:[#allocation7 + $0x3f8] sm:$0xff]
      %v356 = vunpack.c.l.b16 %v100
      %v357 = vunpack.c.h.b16 %v100
      %v358 = vunpack.c.l.b16 %v101
      %v359 = vunpack.c.h.b16 %v101
      %v360 = vunpack.c.l.b16 %v102
      %v361 = vunpack.c.h.b16 %v102
      %v362 = vunpack.c.l.b16 %v103
      %v363 = vunpack.c.h.b16 %v103
      %v364 = vunpack.c.l.b16 %v104
      %v365 = vunpack.c.h.b16 %v104
      %v366 = vunpack.c.l.b16 %v105
      %v367 = vunpack.c.h.b16 %v105
      %v368 = vunpack.c.l.b16 %v106
      %v369 = vunpack.c.h.b16 %v106
      %v370 = vunpack.c.l.b16 %v107
      %v371 = vunpack.c.h.b16 %v107
      %v372 = vunpack.c.l.b16 %v108
      %v373 = vunpack.c.h.b16 %v108
      %v374 = vunpack.c.l.b16 %v109
      %v375 = vunpack.c.h.b16 %v109
      %v376 = vunpack.c.l.b16 %v110
      %v377 = vunpack.c.h.b16 %v110
      %v378 = vunpack.c.l.b16 %v111
      %v379 = vunpack.c.h.b16 %v111
      %v380 = vunpack.c.l.b16 %v112
      %v381 = vunpack.c.h.b16 %v112
      %v382 = vunpack.c.l.b16 %v113
      %v383 = vunpack.c.h.b16 %v113
      %v384 = vunpack.c.l.b16 %v114
      %v385 = vunpack.c.h.b16 %v114
      %v386 = vunpack.c.l.b16 %v115
      %v387 = vunpack.c.h.b16 %v115
      %v388 = vunpack.c.l.b16 %v116
      %v389 = vunpack.c.h.b16 %v116
      %v390 = vunpack.c.l.b16 %v117
      %v391 = vunpack.c.h.b16 %v117
      %v392 = vunpack.c.l.b16 %v118
      %v393 = vunpack.c.h.b16 %v118
      %v394 = vunpack.c.l.b16 %v119
      %v395 = vunpack.c.h.b16 %v119
      %v396 = vunpack.c.l.b16 %v120
      %v397 = vunpack.c.h.b16 %v120
      %v398 = vunpack.c.l.b16 %v121
      %v399 = vunpack.c.h.b16 %v121
      %v400 = vunpack.c.l.b16 %v122
      %v401 = vunpack.c.h.b16 %v122
      %v402 = vunpack.c.l.b16 %v123
      %v403 = vunpack.c.h.b16 %v123
      %v404 = vunpack.c.l.b16 %v124
      %v405 = vunpack.c.h.b16 %v124
      %v406 = vunpack.c.l.b16 %v125
      %v407 = vunpack.c.h.b16 %v125
      %v408 = vunpack.c.l.b16 %v126
      %v409 = vunpack.c.h.b16 %v126
      %v410 = vunpack.c.l.b16 %v127
      %v411 = vunpack.c.h.b16 %v127
      %v412 = vunpack.c.l.b16 %v128
      %v413 = vunpack.c.h.b16 %v128
      %v414 = vunpack.c.l.b16 %v129
      %v415 = vunpack.c.h.b16 %v129
      %v416 = vunpack.c.l.b16 %v130
      %v417 = vunpack.c.h.b16 %v130
      %v418 = vunpack.c.l.b16 %v131
      %v419 = vunpack.c.h.b16 %v131
      %v420 = vunpack.c.l.b16 %v132
      %v421 = vunpack.c.h.b16 %v132
      %v422 = vunpack.c.l.b16 %v133
      %v423 = vunpack.c.h.b16 %v133
      %v424 = vunpack.c.l.b16 %v134
      %v425 = vunpack.c.h.b16 %v134
      %v426 = vunpack.c.l.b16 %v135
      %v427 = vunpack.c.h.b16 %v135
      %v428 = vunpack.c.l.b16 %v136
      %v429 = vunpack.c.h.b16 %v136
      %v430 = vunpack.c.l.b16 %v137
      %v431 = vunpack.c.h.b16 %v137
      %v432 = vunpack.c.l.b16 %v138
      %v433 = vunpack.c.h.b16 %v138
      %v434 = vunpack.c.l.b16 %v139
      %v435 = vunpack.c.h.b16 %v139
      %v436 = vunpack.c.l.b16 %v140
      %v437 = vunpack.c.h.b16 %v140
      %v438 = vunpack.c.l.b16 %v141
      %v439 = vunpack.c.h.b16 %v141
      %v440 = vunpack.c.l.b16 %v142
      %v441 = vunpack.c.h.b16 %v142
      %v442 = vunpack.c.l.b16 %v143
      %v443 = vunpack.c.h.b16 %v143
      %v444 = vunpack.c.l.b16 %v144
      %v445 = vunpack.c.h.b16 %v144
      %v446 = vunpack.c.l.b16 %v145
      %v447 = vunpack.c.h.b16 %v145
      %v448 = vunpack.c.l.b16 %v146
      %v449 = vunpack.c.h.b16 %v146
      %v450 = vunpack.c.l.b16 %v147
      %v451 = vunpack.c.h.b16 %v147
      %v452 = vunpack.c.l.b16 %v148
      %v453 = vunpack.c.h.b16 %v148
      %v454 = vunpack.c.l.b16 %v149
      %v455 = vunpack.c.h.b16 %v149
      %v456 = vunpack.c.l.b16 %v150
      %v457 = vunpack.c.h.b16 %v150
      %v458 = vunpack.c.l.b16 %v151
      %v459 = vunpack.c.h.b16 %v151
      %v460 = vunpack.c.l.b16 %v152
      %v461 = vunpack.c.h.b16 %v152
      %v462 = vunpack.c.l.b16 %v153
      %v463 = vunpack.c.h.b16 %v153
      %v464 = vunpack.c.l.b16 %v154
      %v465 = vunpack.c.h.b16 %v154
      %v466 = vunpack.c.l.b16 %v155
      %v467 = vunpack.c.h.b16 %v155
      %v468 = vunpack.c.l.b16 %v156
      %v469 = vunpack.c.h.b16 %v156
      %v470 = vunpack.c.l.b16 %v157
      %v471 = vunpack.c.h.b16 %v157
      %v472 = vunpack.c.l.b16 %v158
      %v473 = vunpack.c.h.b16 %v158
      %v474 = vunpack.c.l.b16 %v159
      %v475 = vunpack.c.h.b16 %v159
      %v476 = vunpack.c.l.b16 %v160
      %v477 = vunpack.c.h.b16 %v160
      %v478 = vunpack.c.l.b16 %v161
      %v479 = vunpack.c.h.b16 %v161
      %v480 = vunpack.c.l.b16 %v162
      %v481 = vunpack.c.h.b16 %v162
      %v482 = vunpack.c.l.b16 %v163
      %v483 = vunpack.c.h.b16 %v163
      %v484 = vunpack.c.l.b16 %v164
      %v485 = vunpack.c.h.b16 %v164
      %v486 = vunpack.c.l.b16 %v165
      %v487 = vunpack.c.h.b16 %v165
      %v488 = vunpack.c.l.b16 %v166
      %v489 = vunpack.c.h.b16 %v166
      %v490 = vunpack.c.l.b16 %v167
      %v491 = vunpack.c.h.b16 %v167
      %v492 = vunpack.c.l.b16 %v168
      %v493 = vunpack.c.h.b16 %v168
      %v494 = vunpack.c.l.b16 %v169
      %v495 = vunpack.c.h.b16 %v169
      %v496 = vunpack.c.l.b16 %v170
      %v497 = vunpack.c.h.b16 %v170
      %v498 = vunpack.c.l.b16 %v171
      %v499 = vunpack.c.h.b16 %v171
      %v500 = vunpack.c.l.b16 %v172
      %v501 = vunpack.c.h.b16 %v172
      %v502 = vunpack.c.l.b16 %v173
      %v503 = vunpack.c.h.b16 %v173
      %v504 = vunpack.c.l.b16 %v174
      %v505 = vunpack.c.h.b16 %v174
      %v506 = vunpack.c.l.b16 %v175
      %v507 = vunpack.c.h.b16 %v175
      %v508 = vunpack.c.l.b16 %v176
      %v509 = vunpack.c.h.b16 %v176
      %v510 = vunpack.c.l.b16 %v177
      %v511 = vunpack.c.h.b16 %v177
      %v512 = vunpack.c.l.b16 %v178
      %v513 = vunpack.c.h.b16 %v178
      %v514 = vunpack.c.l.b16 %v179
      %v515 = vunpack.c.h.b16 %v179
      %v516 = vunpack.c.l.b16 %v180
      %v517 = vunpack.c.h.b16 %v180
      %v518 = vunpack.c.l.b16 %v181
      %v519 = vunpack.c.h.b16 %v181
      %v520 = vunpack.c.l.b16 %v182
      %v521 = vunpack.c.h.b16 %v182
      %v522 = vunpack.c.l.b16 %v183
      %v523 = vunpack.c.h.b16 %v183
      %v524 = vunpack.c.l.b16 %v184
      %v525 = vunpack.c.h.b16 %v184
      %v526 = vunpack.c.l.b16 %v185
      %v527 = vunpack.c.h.b16 %v185
      %v528 = vunpack.c.l.b16 %v186
      %v529 = vunpack.c.h.b16 %v186
      %v530 = vunpack.c.l.b16 %v187
      %v531 = vunpack.c.h.b16 %v187
      %v532 = vunpack.c.l.b16 %v188
      %v533 = vunpack.c.h.b16 %v188
      %v534 = vunpack.c.l.b16 %v189
      %v535 = vunpack.c.h.b16 %v189
      %v536 = vunpack.c.l.b16 %v190
      %v537 = vunpack.c.h.b16 %v190
      %v538 = vunpack.c.l.b16 %v191
      %v539 = vunpack.c.h.b16 %v191
      %v540 = vunpack.c.l.b16 %v192
      %v541 = vunpack.c.h.b16 %v192
      %v542 = vunpack.c.l.b16 %v193
      %v543 = vunpack.c.h.b16 %v193
      %v544 = vunpack.c.l.b16 %v194
      %v545 = vunpack.c.h.b16 %v194
      %v546 = vunpack.c.l.b16 %v195
      %v547 = vunpack.c.h.b16 %v195
      %v548 = vunpack.c.l.b16 %v196
      %v549 = vunpack.c.h.b16 %v196
      %v550 = vunpack.c.l.b16 %v197
      %v551 = vunpack.c.h.b16 %v197
      %v552 = vunpack.c.l.b16 %v198
      %v553 = vunpack.c.h.b16 %v198
      %v554 = vunpack.c.l.b16 %v199
      %v555 = vunpack.c.h.b16 %v199
      %v556 = vunpack.c.l.b16 %v200
      %v557 = vunpack.c.h.b16 %v200
      %v558 = vunpack.c.l.b16 %v201
      %v559 = vunpack.c.h.b16 %v201
      %v560 = vunpack.c.l.b16 %v202
      %v561 = vunpack.c.h.b16 %v202
      %v562 = vunpack.c.l.b16 %v203
      %v563 = vunpack.c.h.b16 %v203
      %v564 = vunpack.c.l.b16 %v204
      %v565 = vunpack.c.h.b16 %v204
      %v566 = vunpack.c.l.b16 %v205
      %v567 = vunpack.c.h.b16 %v205
      %v568 = vunpack.c.l.b16 %v206
      %v569 = vunpack.c.h.b16 %v206
      %v570 = vunpack.c.l.b16 %v207
      %v571 = vunpack.c.h.b16 %v207
      %v572 = vunpack.c.l.b16 %v208
      %v573 = vunpack.c.h.b16 %v208
      %v574 = vunpack.c.l.b16 %v209
      %v575 = vunpack.c.h.b16 %v209
      %v576 = vunpack.c.l.b16 %v210
      %v577 = vunpack.c.h.b16 %v210
      %v578 = vunpack.c.l.b16 %v211
      %v579 = vunpack.c.h.b16 %v211
      %v580 = vunpack.c.l.b16 %v212
      %v581 = vunpack.c.h.b16 %v212
      %v582 = vunpack.c.l.b16 %v213
      %v583 = vunpack.c.h.b16 %v213
      %v584 = vunpack.c.l.b16 %v214
      %v585 = vunpack.c.h.b16 %v214
      %v586 = vunpack.c.l.b16 %v215
      %v587 = vunpack.c.h.b16 %v215
      %v588 = vunpack.c.l.b16 %v216
      %v589 = vunpack.c.h.b16 %v216
      %v590 = vunpack.c.l.b16 %v217
      %v591 = vunpack.c.h.b16 %v217
      %v592 = vunpack.c.l.b16 %v218
      %v593 = vunpack.c.h.b16 %v218
      %v594 = vunpack.c.l.b16 %v219
      %v595 = vunpack.c.h.b16 %v219
      %v596 = vunpack.c.l.b16 %v220
      %v597 = vunpack.c.h.b16 %v220
      %v598 = vunpack.c.l.b16 %v221
      %v599 = vunpack.c.h.b16 %v221
      %v600 = vunpack.c.l.b16 %v222
      %v601 = vunpack.c.h.b16 %v222
      %v602 = vunpack.c.l.b16 %v223
      %v603 = vunpack.c.h.b16 %v223
      %v604 = vunpack.c.l.b16 %v224
      %v605 = vunpack.c.h.b16 %v224
      %v606 = vunpack.c.l.b16 %v225
      %v607 = vunpack.c.h.b16 %v225
      %v608 = vunpack.c.l.b16 %v226
      %v609 = vunpack.c.h.b16 %v226
      %v610 = vunpack.c.l.b16 %v227
      %v611 = vunpack.c.h.b16 %v227
      %v612 = vpack.c.b16 %v364, %v356
      %v613 = vpack.c.b16 %v365, %v357
      %v614 = vpack.c.b16 %v366, %v358
      %v615 = vpack.c.b16 %v367, %v359
      %v616 = vpack.c.b16 %v368, %v360
      %v617 = vpack.c.b16 %v369, %v361
      %v618 = vpack.c.b16 %v370, %v362
      %v619 = vpack.c.b16 %v371, %v363
      %v620 = vpack.c.b16 %v380, %v372
      %v621 = vpack.c.b16 %v381, %v373
      %v622 = vpack.c.b16 %v382, %v374
      %v623 = vpack.c.b16 %v383, %v375
      %v624 = vpack.c.b16 %v384, %v376
      %v625 = vpack.c.b16 %v385, %v377
      %v626 = vpack.c.b16 %v386, %v378
      %v627 = vpack.c.b16 %v387, %v379
      %v628 = vpack.c.b16 %v396, %v388
      %v629 = vpack.c.b16 %v397, %v389
      %v630 = vpack.c.b16 %v398, %v390
      %v631 = vpack.c.b16 %v399, %v391
      %v632 = vpack.c.b16 %v400, %v392
      %v633 = vpack.c.b16 %v401, %v393
      %v634 = vpack.c.b16 %v402, %v394
      %v635 = vpack.c.b16 %v403, %v395
      %v636 = vpack.c.b16 %v412, %v404
      %v637 = vpack.c.b16 %v413, %v405
      %v638 = vpack.c.b16 %v414, %v406
      %v639 = vpack.c.b16 %v415, %v407
      %v640 = vpack.c.b16 %v416, %v408
      %v641 = vpack.c.b16 %v417, %v409
      %v642 = vpack.c.b16 %v418, %v410
      %v643 = vpack.c.b16 %v419, %v411
      %v644 = vpack.c.b16 %v428, %v420
      %v645 = vpack.c.b16 %v429, %v421
      %v646 = vpack.c.b16 %v430, %v422
      %v647 = vpack.c.b16 %v431, %v423
      %v648 = vpack.c.b16 %v432, %v424
      %v649 = vpack.c.b16 %v433, %v425
      %v650 = vpack.c.b16 %v434, %v426
      %v651 = vpack.c.b16 %v435, %v427
      %v652 = vpack.c.b16 %v444, %v436
      %v653 = vpack.c.b16 %v445, %v437
      %v654 = vpack.c.b16 %v446, %v438
      %v655 = vpack.c.b16 %v447, %v439
      %v656 = vpack.c.b16 %v448, %v440
      %v657 = vpack.c.b16 %v449, %v441
      %v658 = vpack.c.b16 %v450, %v442
      %v659 = vpack.c.b16 %v451, %v443
      %v660 = vpack.c.b16 %v460, %v452
      %v661 = vpack.c.b16 %v461, %v453
      %v662 = vpack.c.b16 %v462, %v454
      %v663 = vpack.c.b16 %v463, %v455
      %v664 = vpack.c.b16 %v464, %v456
      %v665 = vpack.c.b16 %v465, %v457
      %v666 = vpack.c.b16 %v466, %v458
      %v667 = vpack.c.b16 %v467, %v459
      %v668 = vpack.c.b16 %v476, %v468
      %v669 = vpack.c.b16 %v477, %v469
      %v670 = vpack.c.b16 %v478, %v470
      %v671 = vpack.c.b16 %v479, %v471
      %v672 = vpack.c.b16 %v480, %v472
      %v673 = vpack.c.b16 %v481, %v473
      %v674 = vpack.c.b16 %v482, %v474
      %v675 = vpack.c.b16 %v483, %v475
      %v676 = vpack.c.b16 %v492, %v484
      %v677 = vpack.c.b16 %v493, %v485
      %v678 = vpack.c.b16 %v494, %v486
      %v679 = vpack.c.b16 %v495, %v487
      %v680 = vpack.c.b16 %v496, %v488
      %v681 = vpack.c.b16 %v497, %v489
      %v682 = vpack.c.b16 %v498, %v490
      %v683 = vpack.c.b16 %v499, %v491
      %v684 = vpack.c.b16 %v508, %v500
      %v685 = vpack.c.b16 %v509, %v501
      %v686 = vpack.c.b16 %v510, %v502
      %v687 = vpack.c.b16 %v511, %v503
      %v688 = vpack.c.b16 %v512, %v504
      %v689 = vpack.c.b16 %v513, %v505
      %v690 = vpack.c.b16 %v514, %v506
      %v691 = vpack.c.b16 %v515, %v507
      %v692 = vpack.c.b16 %v524, %v516
      %v693 = vpack.c.b16 %v525, %v517
      %v694 = vpack.c.b16 %v526, %v518
      %v695 = vpack.c.b16 %v527, %v519
      %v696 = vpack.c.b16 %v528, %v520
      %v697 = vpack.c.b16 %v529, %v521
      %v698 = vpack.c.b16 %v530, %v522
      %v699 = vpack.c.b16 %v531, %v523
      %v700 = vpack.c.b16 %v540, %v532
      %v701 = vpack.c.b16 %v541, %v533
      %v702 = vpack.c.b16 %v542, %v534
      %v703 = vpack.c.b16 %v543, %v535
      %v704 = vpack.c.b16 %v544, %v536
      %v705 = vpack.c.b16 %v545, %v537
      %v706 = vpack.c.b16 %v546, %v538
      %v707 = vpack.c.b16 %v547, %v539
      %v708 = vpack.c.b16 %v556, %v548
      %v709 = vpack.c.b16 %v557, %v549
      %v710 = vpack.c.b16 %v558, %v550
      %v711 = vpack.c.b16 %v559, %v551
      %v712 = vpack.c.b16 %v560, %v552
      %v713 = vpack.c.b16 %v561, %v553
      %v714 = vpack.c.b16 %v562, %v554
      %v715 = vpack.c.b16 %v563, %v555
      %v716 = vpack.c.b16 %v572, %v564
      %v717 = vpack.c.b16 %v573, %v565
      %v718 = vpack.c.b16 %v574, %v566
      %v719 = vpack.c.b16 %v575, %v567
      %v720 = vpack.c.b16 %v576, %v568
      %v721 = vpack.c.b16 %v577, %v569
      %v722 = vpack.c.b16 %v578, %v570
      %v723 = vpack.c.b16 %v579, %v571
      %v724 = vpack.c.b16 %v588, %v580
      %v725 = vpack.c.b16 %v589, %v581
      %v726 = vpack.c.b16 %v590, %v582
      %v727 = vpack.c.b16 %v591, %v583
      %v728 = vpack.c.b16 %v592, %v584
      %v729 = vpack.c.b16 %v593, %v585
      %v730 = vpack.c.b16 %v594, %v586
      %v731 = vpack.c.b16 %v595, %v587
      %v732 = vpack.c.b16 %v604, %v596
      %v733 = vpack.c.b16 %v605, %v597
      %v734 = vpack.c.b16 %v606, %v598
      %v735 = vpack.c.b16 %v607, %v599
      %v736 = vpack.c.b16 %v608, %v600
      %v737 = vpack.c.b16 %v609, %v601
      %v738 = vpack.c.b16 %v610, %v602
      %v739 = vpack.c.b16 %v611, %v603
      %868 = vmatprep.subr.bf16.mxu0 %v669
      %869 = vmatpush1.bf16.msra.mxu0 %v668
      %870 = vmatprep.subr.bf16.mxu0 %v661
      %871 = vmatpush1.bf16.msra.mxu0 %v660
      %872 = vmatprep.subr.bf16.mxu0 %v653
      %873 = vmatpush1.bf16.msra.mxu0 %v652
      %874 = vmatprep.subr.bf16.mxu0 %v645
      %875 = vmatpush1.bf16.msra.mxu0 %v644
      %876 = vmatprep.subr.bf16.mxu0 %v637
      %877 = vmatpush1.bf16.msra.mxu0 %v636
      %878 = vmatprep.subr.bf16.mxu0 %v629
      %879 = vmatpush1.bf16.msra.mxu0 %v628
      %880 = vmatprep.subr.bf16.mxu0 %v621
      %881 = vmatpush1.bf16.msra.mxu0 %v620
      %882 = vmatprep.subr.bf16.mxu0 %v613
      %883 = vmatpush1.bf16.msra.mxu0 %v612
      %884 = vmatprep.subr.bf16.mxu0 %v733
      %885 = vmatpush2.bf16.msra.mxu0 %v732
      %886 = vmatprep.subr.bf16.mxu0 %v725
      %887 = vmatpush2.bf16.msra.mxu0 %v724
      %888 = vmatprep.subr.bf16.mxu0 %v717
      %889 = vmatpush2.bf16.msra.mxu0 %v716
      %890 = vmatprep.subr.bf16.mxu0 %v709
      %891 = vmatpush2.bf16.msra.mxu0 %v708
      %892 = vmatprep.subr.bf16.mxu0 %v701
      %893 = vmatpush2.bf16.msra.mxu0 %v700
      %894 = vmatprep.subr.bf16.mxu0 %v693
      %895 = vmatpush2.bf16.msra.mxu0 %v692
      %896 = vmatprep.subr.bf16.mxu0 %v685
      %897 = vmatpush2.bf16.msra.mxu0 %v684
      %898 = vmatprep.subr.bf16.mxu0 %v677
      %899 = vmatpush2.bf16.msra.mxu0 %v676
      %900 = vmatprep.mubr.bf16.mxu0 %v99
      %901 = vmatmul.mubr.bf16.gmra.mxu0 %v98
      %v902 = vpop.f32.mrf.mxu0
      %v903 = vadd.f32 0.0, %v902
      %v904 = vpop.f32.mrf.mxu0
      %v905 = vadd.f32 0.0, %v904
      %v906 = vpop.f32.mrf.mxu0
      %v907 = vpop.f32.mrf.mxu0
      %908 = vdwg.mxu0
      %909 = vmatprep.subr.bf16.mxu0 %v671
      %910 = vmatpush1.bf16.msra.mxu0 %v670
      %911 = vmatprep.subr.bf16.mxu0 %v663
      %912 = vmatpush1.bf16.msra.mxu0 %v662
      %913 = vmatprep.subr.bf16.mxu0 %v655
      %914 = vmatpush1.bf16.msra.mxu0 %v654
      %915 = vmatprep.subr.bf16.mxu0 %v647
      %916 = vmatpush1.bf16.msra.mxu0 %v646
      %917 = vmatprep.subr.bf16.mxu0 %v639
      %918 = vmatpush1.bf16.msra.mxu0 %v638
      %919 = vmatprep.subr.bf16.mxu0 %v631
      %920 = vmatpush1.bf16.msra.mxu0 %v630
      %921 = vmatprep.subr.bf16.mxu0 %v623
      %922 = vmatpush1.bf16.msra.mxu0 %v622
      %923 = vmatprep.subr.bf16.mxu0 %v615
      %924 = vmatpush1.bf16.msra.mxu0 %v614
      %925 = vmatprep.subr.bf16.mxu0 %v735
      %926 = vmatpush2.bf16.msra.mxu0 %v734
      %927 = vmatprep.subr.bf16.mxu0 %v727
      %928 = vmatpush2.bf16.msra.mxu0 %v726
      %929 = vmatprep.subr.bf16.mxu0 %v719
      %930 = vmatpush2.bf16.msra.mxu0 %v718
      %931 = vmatprep.subr.bf16.mxu0 %v711
      %932 = vmatpush2.bf16.msra.mxu0 %v710
      %933 = vmatprep.subr.bf16.mxu0 %v703
      %934 = vmatpush2.bf16.msra.mxu0 %v702
      %935 = vmatprep.subr.bf16.mxu0 %v695
      %936 = vmatpush2.bf16.msra.mxu0 %v694
      %937 = vmatprep.subr.bf16.mxu0 %v687
      %938 = vmatpush2.bf16.msra.mxu0 %v686
      %939 = vmatprep.subr.bf16.mxu0 %v679
      %940 = vmatpush2.bf16.msra.mxu0 %v678
      %941 = vmatprep.mubr.bf16.mxu0 %v99
      %942 = vmatmul.mubr.bf16.gmra.mxu0 %v98
      %v943 = vpop.f32.mrf.mxu0
      %v944 = vadd.f32 0.0, %v943
      %v945 = vpop.f32.mrf.mxu0
      %v946 = vadd.f32 0.0, %v945
      %v947 = vpop.f32.mrf.mxu0
      %v948 = vpop.f32.mrf.mxu0
      %949 = vdwg.mxu0
      %950 = vmatprep.subr.bf16.mxu0 %v673
      %951 = vmatpush1.bf16.msra.mxu0 %v672
      %952 = vmatprep.subr.bf16.mxu0 %v665
      %953 = vmatpush1.bf16.msra.mxu0 %v664
      %954 = vmatprep.subr.bf16.mxu0 %v657
      %955 = vmatpush1.bf16.msra.mxu0 %v656
      %956 = vmatprep.subr.bf16.mxu0 %v649
      %957 = vmatpush1.bf16.msra.mxu0 %v648
      %958 = vmatprep.subr.bf16.mxu0 %v641
      %959 = vmatpush1.bf16.msra.mxu0 %v640
      %960 = vmatprep.subr.bf16.mxu0 %v633
      %961 = vmatpush1.bf16.msra.mxu0 %v632
      %962 = vmatprep.subr.bf16.mxu0 %v625
      %963 = vmatpush1.bf16.msra.mxu0 %v624
      %964 = vmatprep.subr.bf16.mxu0 %v617
      %965 = vmatpush1.bf16.msra.mxu0 %v616
      %966 = vmatprep.subr.bf16.mxu0 %v737
      %967 = vmatpush2.bf16.msra.mxu0 %v736
      %968 = vmatprep.subr.bf16.mxu0 %v729
      %969 = vmatpush2.bf16.msra.mxu0 %v728
      %970 = vmatprep.subr.bf16.mxu0 %v721
      %971 = vmatpush2.bf16.msra.mxu0 %v720
      %972 = vmatprep.subr.bf16.mxu0 %v713
      %973 = vmatpush2.bf16.msra.mxu0 %v712
      %974 = vmatprep.subr.bf16.mxu0 %v705
      %975 = vmatpush2.bf16.msra.mxu0 %v704
      %976 = vmatprep.subr.bf16.mxu0 %v697
      %977 = vmatpush2.bf16.msra.mxu0 %v696
      %978 = vmatprep.subr.bf16.mxu0 %v689
      %979 = vmatpush2.bf16.msra.mxu0 %v688
      %980 = vmatprep.subr.bf16.mxu0 %v681
      %981 = vmatpush2.bf16.msra.mxu0 %v680
      %982 = vmatprep.mubr.bf16.mxu0 %v99
      %983 = vmatmul.mubr.bf16.gmra.mxu0 %v98
      %v984 = vpop.f32.mrf.mxu0
      %v985 = vadd.f32 0.0, %v984
      %v986 = vpop.f32.mrf.mxu0
      %v987 = vadd.f32 0.0, %v986
      %v988 = vpop.f32.mrf.mxu0
      %v989 = vpop.f32.mrf.mxu0
      %990 = vdwg.mxu0
      %991 = vmatprep.subr.bf16.mxu0 %v675
      %992 = vmatpush1.bf16.msra.mxu0 %v674
      %993 = vmatprep.subr.bf16.mxu0 %v667
      %994 = vmatpush1.bf16.msra.mxu0 %v666
      %995 = vmatprep.subr.bf16.mxu0 %v659
      %996 = vmatpush1.bf16.msra.mxu0 %v658
      %997 = vmatprep.subr.bf16.mxu0 %v651
      %998 = vmatpush1.bf16.msra.mxu0 %v650
      %999 = vmatprep.subr.bf16.mxu0 %v643
      %1000 = vmatpush1.bf16.msra.mxu0 %v642
      %1001 = vmatprep.subr.bf16.mxu0 %v635
      %1002 = vmatpush1.bf16.msra.mxu0 %v634
      %1003 = vmatprep.subr.bf16.mxu0 %v627
      %1004 = vmatpush1.bf16.msra.mxu0 %v626
      %1005 = vmatprep.subr.bf16.mxu0 %v619
      %1006 = vmatpush1.bf16.msra.mxu0 %v618
      %1007 = vmatprep.subr.bf16.mxu0 %v739
      %1008 = vmatpush2.bf16.msra.mxu0 %v738
      %1009 = vmatprep.subr.bf16.mxu0 %v731
      %1010 = vmatpush2.bf16.msra.mxu0 %v730
      %1011 = vmatprep.subr.bf16.mxu0 %v723
      %1012 = vmatpush2.bf16.msra.mxu0 %v722
      %1013 = vmatprep.subr.bf16.mxu0 %v715
      %1014 = vmatpush2.bf16.msra.mxu0 %v714
      %1015 = vmatprep.subr.bf16.mxu0 %v707
      %1016 = vmatpush2.bf16.msra.mxu0 %v706
      %1017 = vmatprep.subr.bf16.mxu0 %v699
      %1018 = vmatpush2.bf16.msra.mxu0 %v698
      %1019 = vmatprep.subr.bf16.mxu0 %v691
      %1020 = vmatpush2.bf16.msra.mxu0 %v690
      %1021 = vmatprep.subr.bf16.mxu0 %v683
      %1022 = vmatpush2.bf16.msra.mxu0 %v682
      %1023 = vmatprep.mubr.bf16.mxu0 %v99
      %1024 = vmatmul.mubr.bf16.gmra.mxu0 %v98
      %v1025 = vpop.f32.mrf.mxu0
      %v1026 = vadd.f32 0.0, %v1025
      %v1027 = vpop.f32.mrf.mxu0
      %v1028 = vadd.f32 0.0, %v1027
      %v1029 = vpop.f32.mrf.mxu0
      %v1030 = vpop.f32.mrf.mxu0
      %1031 = vdwg.mxu0
      %v1032 = vadd.f32 %v88, %v903
      %v1033 = vadd.f32 %v89, %v905
      %v1034 = vadd.f32 %v90, %v944
      %v1035 = vadd.f32 %v91, %v946
      %v1036 = vadd.f32 %v92, %v985
      %v1037 = vadd.f32 %v93, %v987
      %v1038 = vadd.f32 %v94, %v1026
      %v1039 = vadd.f32 %v95, %v1028
      %v1040 = vld [vmem:[#allocation3] sm:$0xff]
      %v1041 = vld [vmem:[#allocation3 + $0x8] sm:$0xff]
      %v1042 = vxor.u32 %v1032, 2147483648
      %v1043 = vxor.u32 %v1033, 2147483648
      %v1044 = vmul.f32 %v1042, 1.442695
      %v1045 = vpow.pop %v1044
      %v1046 = vmul.f32 %v1043, 1.442695
      %v1047 = vpow.pop %v1046
      %v1048 = vadd.f32 %v1045, 1.0
      %v1049 = vadd.f32 %v1047, 1.0
      %v1050 = vrcp.pop %v1048
      %v1051 = vmul.f32 1.0, %v1050
      %v1052 = vrcp.pop %v1049
      %v1053 = vmul.f32 1.0, %v1052
      %v1054 = vxor.u32 %v1034, 2147483648
      %v1055 = vxor.u32 %v1035, 2147483648
      %v1056 = vmul.f32 %v1054, 1.442695
      %v1057 = vpow.pop %v1056
      %v1058 = vmul.f32 %v1055, 1.442695
      %v1059 = vpow.pop %v1058
      %v1060 = vadd.f32 %v1057, 1.0
      %v1061 = vadd.f32 %v1059, 1.0
      %v1062 = vrcp.pop %v1060
      %v1063 = vmul.f32 1.0, %v1062
      %v1064 = vrcp.pop %v1061
      %v1065 = vmul.f32 1.0, %v1064
      %v1066 = vtanh.pop %v1036
      %v1067 = vtanh.pop %v1037
      %v1068 = vxor.u32 %v1038, 2147483648
      %v1069 = vxor.u32 %v1039, 2147483648
      %v1070 = vmul.f32 %v1068, 1.442695
      %v1071 = vpow.pop %v1070
      %v1072 = vmul.f32 %v1069, 1.442695
      %v1073 = vpow.pop %v1072
      %v1074 = vadd.f32 %v1071, 1.0
      %v1075 = vadd.f32 %v1073, 1.0
      %v1076 = vrcp.pop %v1074
      %v1077 = vmul.f32 1.0, %v1076
      %v1078 = vrcp.pop %v1075
      %v1079 = vmul.f32 1.0, %v1078
      %v1080 = vmul.f32 %v1063, %v1040
      %v1081 = vmul.f32 %v1065, %v1041
      %v1082 = vmul.f32 %v1051, %v1066
      %v1083 = vmul.f32 %v1053, %v1067
      %v1084 = vadd.f32 %v1080, %v1082
      %v1085 = vadd.f32 %v1081, %v1083
      %v1086 = vtanh.pop %v1084
      %v1087 = vtanh.pop %v1085
      %v1088 = vmul.f32 %v1077, %v1086
      %v1089 = vmul.f32 %v1079, %v1087
      %1090 = vst [vmem:[#allocation2] sm:$0xff] %v1088
      %1091 = vst [vmem:[#allocation2 + $0x8] sm:$0xff] %v1089
      %1092 = vst [vmem:[#allocation3] sm:$0xff] %v1084
      %1093 = vst [vmem:[#allocation3 + $0x8] sm:$0xff] %v1085
    $region38: #{tpu_custom_call.1} parent=1 // loop_footer
      %s80 = sadd.s32 1, %s76
    $region39: #{tpu_custom_call.1} parent=1 // loop_footer_branch
      %75 = sbr.rel target = $region35
    $region40: #{tpu_custom_call.1} parent=1 // loop_exit
      _
    %1094 = vst [vmem:[#allocation3] sm:$0xff] 0.0
    %1095 = vst [vmem:[#allocation3 + $0x8] sm:$0xff] 0.0
    %v1096 = vld [vmem:[#allocation10] sm:$0xff]
    %v1097 = vld [vmem:[#allocation2] sm:$0xff]
    %v1098 = vld [vmem:[#allocation2 + $0x8] sm:$0xff]
    %v1099 = vpack.c.bf16 %v1097, %v1097
    %v1100 = vpack.c.bf16 %v1098, %v1098
    %v1101 = vld [vmem:[#allocation9] sm:$0xff]
    %v1102 = vld [vmem:[#allocation9 + $0x8] sm:$0xff]
    %v1103 = vld [vmem:[#allocation9 + $0x10] sm:$0xff]
    %v1104 = vld [vmem:[#allocation9 + $0x18] sm:$0xff]
    %v1105 = vld [vmem:[#allocation9 + $0x20] sm:$0xff]
    %v1106 = vld [vmem:[#allocation9 + $0x28] sm:$0xff]
    %v1107 = vld [vmem:[#allocation9 + $0x30] sm:$0xff]
    %v1108 = vld [vmem:[#allocation9 + $0x38] sm:$0xff]
    %v1109 = vld [vmem:[#allocation9 + $0x40] sm:$0xff]
    %v1110 = vld [vmem:[#allocation9 + $0x48] sm:$0xff]
    %v1111 = vld [vmem:[#allocation9 + $0x50] sm:$0xff]
    %v1112 = vld [vmem:[#allocation9 + $0x58] sm:$0xff]
    %v1113 = vld [vmem:[#allocation9 + $0x60] sm:$0xff]
    %v1114 = vld [vmem:[#allocation9 + $0x68] sm:$0xff]
    %v1115 = vld [vmem:[#allocation9 + $0x70] sm:$0xff]
    %v1116 = vld [vmem:[#allocation9 + $0x78] sm:$0xff]
    %v1117 = vld [vmem:[#allocation9 + $0x80] sm:$0xff]
    %v1118 = vld [vmem:[#allocation9 + $0x88] sm:$0xff]
    %v1119 = vld [vmem:[#allocation9 + $0x90] sm:$0xff]
    %v1120 = vld [vmem:[#allocation9 + $0x98] sm:$0xff]
    %v1121 = vld [vmem:[#allocation9 + $0xa0] sm:$0xff]
    %v1122 = vld [vmem:[#allocation9 + $0xa8] sm:$0xff]
    %v1123 = vld [vmem:[#allocation9 + $0xb0] sm:$0xff]
    %v1124 = vld [vmem:[#allocation9 + $0xb8] sm:$0xff]
    %v1125 = vld [vmem:[#allocation9 + $0xc0] sm:$0xff]
    %v1126 = vld [vmem:[#allocation9 + $0xc8] sm:$0xff]
    %v1127 = vld [vmem:[#allocation9 + $0xd0] sm:$0xff]
    %v1128 = vld [vmem:[#allocation9 + $0xd8] sm:$0xff]
    %v1129 = vld [vmem:[#allocation9 + $0xe0] sm:$0xff]
    %v1130 = vld [vmem:[#allocation9 + $0xe8] sm:$0xff]
    %v1131 = vld [vmem:[#allocation9 + $0xf0] sm:$0xff]
    %v1132 = vld [vmem:[#allocation9 + $0xf8] sm:$0xff]
    %v1133 = vld [vmem:[#allocation9 + $0x100] sm:$0xff]
    %v1134 = vld [vmem:[#allocation9 + $0x108] sm:$0xff]
    %v1135 = vld [vmem:[#allocation9 + $0x110] sm:$0xff]
    %v1136 = vld [vmem:[#allocation9 + $0x118] sm:$0xff]
    %v1137 = vld [vmem:[#allocation9 + $0x120] sm:$0xff]
    %v1138 = vld [vmem:[#allocation9 + $0x128] sm:$0xff]
    %v1139 = vld [vmem:[#allocation9 + $0x130] sm:$0xff]
    %v1140 = vld [vmem:[#allocation9 + $0x138] sm:$0xff]
    %v1141 = vld [vmem:[#allocation9 + $0x140] sm:$0xff]
    %v1142 = vld [vmem:[#allocation9 + $0x148] sm:$0xff]
    %v1143 = vld [vmem:[#allocation9 + $0x150] sm:$0xff]
    %v1144 = vld [vmem:[#allocation9 + $0x158] sm:$0xff]
    %v1145 = vld [vmem:[#allocation9 + $0x160] sm:$0xff]
    %v1146 = vld [vmem:[#allocation9 + $0x168] sm:$0xff]
    %v1147 = vld [vmem:[#allocation9 + $0x170] sm:$0xff]
    %v1148 = vld [vmem:[#allocation9 + $0x178] sm:$0xff]
    %v1149 = vld [vmem:[#allocation9 + $0x180] sm:$0xff]
    %v1150 = vld [vmem:[#allocation9 + $0x188] sm:$0xff]
    %v1151 = vld [vmem:[#allocation9 + $0x190] sm:$0xff]
    %v1152 = vld [vmem:[#allocation9 + $0x198] sm:$0xff]
    %v1153 = vld [vmem:[#allocation9 + $0x1a0] sm:$0xff]
    %v1154 = vld [vmem:[#allocation9 + $0x1a8] sm:$0xff]
    %v1155 = vld [vmem:[#allocation9 + $0x1b0] sm:$0xff]
    %v1156 = vld [vmem:[#allocation9 + $0x1b8] sm:$0xff]
    %v1157 = vld [vmem:[#allocation9 + $0x1c0] sm:$0xff]
    %v1158 = vld [vmem:[#allocation9 + $0x1c8] sm:$0xff]
    %v1159 = vld [vmem:[#allocation9 + $0x1d0] sm:$0xff]
    %v1160 = vld [vmem:[#allocation9 + $0x1d8] sm:$0xff]
    %v1161 = vld [vmem:[#allocation9 + $0x1e0] sm:$0xff]
    %v1162 = vld [vmem:[#allocation9 + $0x1e8] sm:$0xff]
    %v1163 = vld [vmem:[#allocation9 + $0x1f0] sm:$0xff]
    %v1164 = vld [vmem:[#allocation9 + $0x1f8] sm:$0xff]
    %v1165 = vld [vmem:[#allocation9 + $0x200] sm:$0xff]
    %v1166 = vld [vmem:[#allocation9 + $0x208] sm:$0xff]
    %v1167 = vld [vmem:[#allocation9 + $0x210] sm:$0xff]
    %v1168 = vld [vmem:[#allocation9 + $0x218] sm:$0xff]
    %v1169 = vld [vmem:[#allocation9 + $0x220] sm:$0xff]
    %v1170 = vld [vmem:[#allocation9 + $0x228] sm:$0xff]
    %v1171 = vld [vmem:[#allocation9 + $0x230] sm:$0xff]
    %v1172 = vld [vmem:[#allocation9 + $0x238] sm:$0xff]
    %v1173 = vld [vmem:[#allocation9 + $0x240] sm:$0xff]
    %v1174 = vld [vmem:[#allocation9 + $0x248] sm:$0xff]
    %v1175 = vld [vmem:[#allocation9 + $0x250] sm:$0xff]
    %v1176 = vld [vmem:[#allocation9 + $0x258] sm:$0xff]
    %v1177 = vld [vmem:[#allocation9 + $0x260] sm:$0xff]
    %v1178 = vld [vmem:[#allocation9 + $0x268] sm:$0xff]
    %v1179 = vld [vmem:[#allocation9 + $0x270] sm:$0xff]
    %v1180 = vld [vmem:[#allocation9 + $0x278] sm:$0xff]
    %v1181 = vld [vmem:[#allocation9 + $0x280] sm:$0xff]
    %v1182 = vld [vmem:[#allocation9 + $0x288] sm:$0xff]
    %v1183 = vld [vmem:[#allocation9 + $0x290] sm:$0xff]
    %v1184 = vld [vmem:[#allocation9 + $0x298] sm:$0xff]
    %v1185 = vld [vmem:[#allocation9 + $0x2a0] sm:$0xff]
    %v1186 = vld [vmem:[#allocation9 + $0x2a8] sm:$0xff]
    %v1187 = vld [vmem:[#allocation9 + $0x2b0] sm:$0xff]
    %v1188 = vld [vmem:[#allocation9 + $0x2b8] sm:$0xff]
    %v1189 = vld [vmem:[#allocation9 + $0x2c0] sm:$0xff]
    %v1190 = vld [vmem:[#allocation9 + $0x2c8] sm:$0xff]
    %v1191 = vld [vmem:[#allocation9 + $0x2d0] sm:$0xff]
    %v1192 = vld [vmem:[#allocation9 + $0x2d8] sm:$0xff]
    %v1193 = vld [vmem:[#allocation9 + $0x2e0] sm:$0xff]
    %v1194 = vld [vmem:[#allocation9 + $0x2e8] sm:$0xff]
    %v1195 = vld [vmem:[#allocation9 + $0x2f0] sm:$0xff]
    %v1196 = vld [vmem:[#allocation9 + $0x2f8] sm:$0xff]
    %v1197 = vld [vmem:[#allocation9 + $0x300] sm:$0xff]
    %v1198 = vld [vmem:[#allocation9 + $0x308] sm:$0xff]
    %v1199 = vld [vmem:[#allocation9 + $0x310] sm:$0xff]
    %v1200 = vld [vmem:[#allocation9 + $0x318] sm:$0xff]
    %v1201 = vld [vmem:[#allocation9 + $0x320] sm:$0xff]
    %v1202 = vld [vmem:[#allocation9 + $0x328] sm:$0xff]
    %v1203 = vld [vmem:[#allocation9 + $0x330] sm:$0xff]
    %v1204 = vld [vmem:[#allocation9 + $0x338] sm:$0xff]
    %v1205 = vld [vmem:[#allocation9 + $0x340] sm:$0xff]
    %v1206 = vld [vmem:[#allocation9 + $0x348] sm:$0xff]
    %v1207 = vld [vmem:[#allocation9 + $0x350] sm:$0xff]
    %v1208 = vld [vmem:[#allocation9 + $0x358] sm:$0xff]
    %v1209 = vld [vmem:[#allocation9 + $0x360] sm:$0xff]
    %v1210 = vld [vmem:[#allocation9 + $0x368] sm:$0xff]
    %v1211 = vld [vmem:[#allocation9 + $0x370] sm:$0xff]
    %v1212 = vld [vmem:[#allocation9 + $0x378] sm:$0xff]
    %v1213 = vld [vmem:[#allocation9 + $0x380] sm:$0xff]
    %v1214 = vld [vmem:[#allocation9 + $0x388] sm:$0xff]
    %v1215 = vld [vmem:[#allocation9 + $0x390] sm:$0xff]
    %v1216 = vld [vmem:[#allocation9 + $0x398] sm:$0xff]
    %v1217 = vld [vmem:[#allocation9 + $0x3a0] sm:$0xff]
    %v1218 = vld [vmem:[#allocation9 + $0x3a8] sm:$0xff]
    %v1219 = vld [vmem:[#allocation9 + $0x3b0] sm:$0xff]
    %v1220 = vld [vmem:[#allocation9 + $0x3b8] sm:$0xff]
    %v1221 = vld [vmem:[#allocation9 + $0x3c0] sm:$0xff]
    %v1222 = vld [vmem:[#allocation9 + $0x3c8] sm:$0xff]
    %v1223 = vld [vmem:[#allocation9 + $0x3d0] sm:$0xff]
    %v1224 = vld [vmem:[#allocation9 + $0x3d8] sm:$0xff]
    %v1225 = vld [vmem:[#allocation9 + $0x3e0] sm:$0xff]
    %v1226 = vld [vmem:[#allocation9 + $0x3e8] sm:$0xff]
    %v1227 = vld [vmem:[#allocation9 + $0x3f0] sm:$0xff]
    %v1228 = vld [vmem:[#allocation9 + $0x3f8] sm:$0xff]
    %v1357 = vunpack.c.l.b16 %v1101
    %v1358 = vunpack.c.h.b16 %v1101
    %v1359 = vunpack.c.l.b16 %v1102
    %v1360 = vunpack.c.h.b16 %v1102
    %v1361 = vunpack.c.l.b16 %v1103
    %v1362 = vunpack.c.h.b16 %v1103
    %v1363 = vunpack.c.l.b16 %v1104
    %v1364 = vunpack.c.h.b16 %v1104
    %v1365 = vunpack.c.l.b16 %v1105
    %v1366 = vunpack.c.h.b16 %v1105
    %v1367 = vunpack.c.l.b16 %v1106
    %v1368 = vunpack.c.h.b16 %v1106
    %v1369 = vunpack.c.l.b16 %v1107
    %v1370 = vunpack.c.h.b16 %v1107
    %v1371 = vunpack.c.l.b16 %v1108
    %v1372 = vunpack.c.h.b16 %v1108
    %v1373 = vunpack.c.l.b16 %v1109
    %v1374 = vunpack.c.h.b16 %v1109
    %v1375 = vunpack.c.l.b16 %v1110
    %v1376 = vunpack.c.h.b16 %v1110
    %v1377 = vunpack.c.l.b16 %v1111
    %v1378 = vunpack.c.h.b16 %v1111
    %v1379 = vunpack.c.l.b16 %v1112
    %v1380 = vunpack.c.h.b16 %v1112
    %v1381 = vunpack.c.l.b16 %v1113
    %v1382 = vunpack.c.h.b16 %v1113
    %v1383 = vunpack.c.l.b16 %v1114
    %v1384 = vunpack.c.h.b16 %v1114
    %v1385 = vunpack.c.l.b16 %v1115
    %v1386 = vunpack.c.h.b16 %v1115
    %v1387 = vunpack.c.l.b16 %v1116
    %v1388 = vunpack.c.h.b16 %v1116
    %v1389 = vunpack.c.l.b16 %v1117
    %v1390 = vunpack.c.h.b16 %v1117
    %v1391 = vunpack.c.l.b16 %v1118
    %v1392 = vunpack.c.h.b16 %v1118
    %v1393 = vunpack.c.l.b16 %v1119
    %v1394 = vunpack.c.h.b16 %v1119
    %v1395 = vunpack.c.l.b16 %v1120
    %v1396 = vunpack.c.h.b16 %v1120
    %v1397 = vunpack.c.l.b16 %v1121
    %v1398 = vunpack.c.h.b16 %v1121
    %v1399 = vunpack.c.l.b16 %v1122
    %v1400 = vunpack.c.h.b16 %v1122
    %v1401 = vunpack.c.l.b16 %v1123
    %v1402 = vunpack.c.h.b16 %v1123
    %v1403 = vunpack.c.l.b16 %v1124
    %v1404 = vunpack.c.h.b16 %v1124
    %v1405 = vunpack.c.l.b16 %v1125
    %v1406 = vunpack.c.h.b16 %v1125
    %v1407 = vunpack.c.l.b16 %v1126
    %v1408 = vunpack.c.h.b16 %v1126
    %v1409 = vunpack.c.l.b16 %v1127
    %v1410 = vunpack.c.h.b16 %v1127
    %v1411 = vunpack.c.l.b16 %v1128
    %v1412 = vunpack.c.h.b16 %v1128
    %v1413 = vunpack.c.l.b16 %v1129
    %v1414 = vunpack.c.h.b16 %v1129
    %v1415 = vunpack.c.l.b16 %v1130
    %v1416 = vunpack.c.h.b16 %v1130
    %v1417 = vunpack.c.l.b16 %v1131
    %v1418 = vunpack.c.h.b16 %v1131
    %v1419 = vunpack.c.l.b16 %v1132
    %v1420 = vunpack.c.h.b16 %v1132
    %v1421 = vunpack.c.l.b16 %v1133
    %v1422 = vunpack.c.h.b16 %v1133
    %v1423 = vunpack.c.l.b16 %v1134
    %v1424 = vunpack.c.h.b16 %v1134
    %v1425 = vunpack.c.l.b16 %v1135
    %v1426 = vunpack.c.h.b16 %v1135
    %v1427 = vunpack.c.l.b16 %v1136
    %v1428 = vunpack.c.h.b16 %v1136
    %v1429 = vunpack.c.l.b16 %v1137
    %v1430 = vunpack.c.h.b16 %v1137
    %v1431 = vunpack.c.l.b16 %v1138
    %v1432 = vunpack.c.h.b16 %v1138
    %v1433 = vunpack.c.l.b16 %v1139
    %v1434 = vunpack.c.h.b16 %v1139
    %v1435 = vunpack.c.l.b16 %v1140
    %v1436 = vunpack.c.h.b16 %v1140
    %v1437 = vunpack.c.l.b16 %v1141
    %v1438 = vunpack.c.h.b16 %v1141
    %v1439 = vunpack.c.l.b16 %v1142
    %v1440 = vunpack.c.h.b16 %v1142
    %v1441 = vunpack.c.l.b16 %v1143
    %v1442 = vunpack.c.h.b16 %v1143
    %v1443 = vunpack.c.l.b16 %v1144
    %v1444 = vunpack.c.h.b16 %v1144
    %v1445 = vunpack.c.l.b16 %v1145
    %v1446 = vunpack.c.h.b16 %v1145
    %v1447 = vunpack.c.l.b16 %v1146
    %v1448 = vunpack.c.h.b16 %v1146
    %v1449 = vunpack.c.l.b16 %v1147
    %v1450 = vunpack.c.h.b16 %v1147
    %v1451 = vunpack.c.l.b16 %v1148
    %v1452 = vunpack.c.h.b16 %v1148
    %v1453 = vunpack.c.l.b16 %v1149
    %v1454 = vunpack.c.h.b16 %v1149
    %v1455 = vunpack.c.l.b16 %v1150
    %v1456 = vunpack.c.h.b16 %v1150
    %v1457 = vunpack.c.l.b16 %v1151
    %v1458 = vunpack.c.h.b16 %v1151
    %v1459 = vunpack.c.l.b16 %v1152
    %v1460 = vunpack.c.h.b16 %v1152
    %v1461 = vunpack.c.l.b16 %v1153
    %v1462 = vunpack.c.h.b16 %v1153
    %v1463 = vunpack.c.l.b16 %v1154
    %v1464 = vunpack.c.h.b16 %v1154
    %v1465 = vunpack.c.l.b16 %v1155
    %v1466 = vunpack.c.h.b16 %v1155
    %v1467 = vunpack.c.l.b16 %v1156
    %v1468 = vunpack.c.h.b16 %v1156
    %v1469 = vunpack.c.l.b16 %v1157
    %v1470 = vunpack.c.h.b16 %v1157
    %v1471 = vunpack.c.l.b16 %v1158
    %v1472 = vunpack.c.h.b16 %v1158
    %v1473 = vunpack.c.l.b16 %v1159
    %v1474 = vunpack.c.h.b16 %v1159
    %v1475 = vunpack.c.l.b16 %v1160
    %v1476 = vunpack.c.h.b16 %v1160
    %v1477 = vunpack.c.l.b16 %v1161
    %v1478 = vunpack.c.h.b16 %v1161
    %v1479 = vunpack.c.l.b16 %v1162
    %v1480 = vunpack.c.h.b16 %v1162
    %v1481 = vunpack.c.l.b16 %v1163
    %v1482 = vunpack.c.h.b16 %v1163
    %v1483 = vunpack.c.l.b16 %v1164
    %v1484 = vunpack.c.h.b16 %v1164
    %v1485 = vunpack.c.l.b16 %v1165
    %v1486 = vunpack.c.h.b16 %v1165
    %v1487 = vunpack.c.l.b16 %v1166
    %v1488 = vunpack.c.h.b16 %v1166
    %v1489 = vunpack.c.l.b16 %v1167
    %v1490 = vunpack.c.h.b16 %v1167
    %v1491 = vunpack.c.l.b16 %v1168
    %v1492 = vunpack.c.h.b16 %v1168
    %v1493 = vunpack.c.l.b16 %v1169
    %v1494 = vunpack.c.h.b16 %v1169
    %v1495 = vunpack.c.l.b16 %v1170
    %v1496 = vunpack.c.h.b16 %v1170
    %v1497 = vunpack.c.l.b16 %v1171
    %v1498 = vunpack.c.h.b16 %v1171
    %v1499 = vunpack.c.l.b16 %v1172
    %v1500 = vunpack.c.h.b16 %v1172
    %v1501 = vunpack.c.l.b16 %v1173
    %v1502 = vunpack.c.h.b16 %v1173
    %v1503 = vunpack.c.l.b16 %v1174
    %v1504 = vunpack.c.h.b16 %v1174
    %v1505 = vunpack.c.l.b16 %v1175
    %v1506 = vunpack.c.h.b16 %v1175
    %v1507 = vunpack.c.l.b16 %v1176
    %v1508 = vunpack.c.h.b16 %v1176
    %v1509 = vunpack.c.l.b16 %v1177
    %v1510 = vunpack.c.h.b16 %v1177
    %v1511 = vunpack.c.l.b16 %v1178
    %v1512 = vunpack.c.h.b16 %v1178
    %v1513 = vunpack.c.l.b16 %v1179
    %v1514 = vunpack.c.h.b16 %v1179
    %v1515 = vunpack.c.l.b16 %v1180
    %v1516 = vunpack.c.h.b16 %v1180
    %v1517 = vunpack.c.l.b16 %v1181
    %v1518 = vunpack.c.h.b16 %v1181
    %v1519 = vunpack.c.l.b16 %v1182
    %v1520 = vunpack.c.h.b16 %v1182
    %v1521 = vunpack.c.l.b16 %v1183
    %v1522 = vunpack.c.h.b16 %v1183
    %v1523 = vunpack.c.l.b16 %v1184
    %v1524 = vunpack.c.h.b16 %v1184
    %v1525 = vunpack.c.l.b16 %v1185
    %v1526 = vunpack.c.h.b16 %v1185
    %v1527 = vunpack.c.l.b16 %v1186
    %v1528 = vunpack.c.h.b16 %v1186
    %v1529 = vunpack.c.l.b16 %v1187
    %v1530 = vunpack.c.h.b16 %v1187
    %v1531 = vunpack.c.l.b16 %v1188
    %v1532 = vunpack.c.h.b16 %v1188
    %v1533 = vunpack.c.l.b16 %v1189
    %v1534 = vunpack.c.h.b16 %v1189
    %v1535 = vunpack.c.l.b16 %v1190
    %v1536 = vunpack.c.h.b16 %v1190
    %v1537 = vunpack.c.l.b16 %v1191
    %v1538 = vunpack.c.h.b16 %v1191
    %v1539 = vunpack.c.l.b16 %v1192
    %v1540 = vunpack.c.h.b16 %v1192
    %v1541 = vunpack.c.l.b16 %v1193
    %v1542 = vunpack.c.h.b16 %v1193
    %v1543 = vunpack.c.l.b16 %v1194
    %v1544 = vunpack.c.h.b16 %v1194
    %v1545 = vunpack.c.l.b16 %v1195
    %v1546 = vunpack.c.h.b16 %v1195
    %v1547 = vunpack.c.l.b16 %v1196
    %v1548 = vunpack.c.h.b16 %v1196
    %v1549 = vunpack.c.l.b16 %v1197
    %v1550 = vunpack.c.h.b16 %v1197
    %v1551 = vunpack.c.l.b16 %v1198
    %v1552 = vunpack.c.h.b16 %v1198
    %v1553 = vunpack.c.l.b16 %v1199
    %v1554 = vunpack.c.h.b16 %v1199
    %v1555 = vunpack.c.l.b16 %v1200
    %v1556 = vunpack.c.h.b16 %v1200
    %v1557 = vunpack.c.l.b16 %v1201
    %v1558 = vunpack.c.h.b16 %v1201
    %v1559 = vunpack.c.l.b16 %v1202
    %v1560 = vunpack.c.h.b16 %v1202
    %v1561 = vunpack.c.l.b16 %v1203
    %v1562 = vunpack.c.h.b16 %v1203
    %v1563 = vunpack.c.l.b16 %v1204
    %v1564 = vunpack.c.h.b16 %v1204
    %v1565 = vunpack.c.l.b16 %v1205
    %v1566 = vunpack.c.h.b16 %v1205
    %v1567 = vunpack.c.l.b16 %v1206
    %v1568 = vunpack.c.h.b16 %v1206
    %v1569 = vunpack.c.l.b16 %v1207
    %v1570 = vunpack.c.h.b16 %v1207
    %v1571 = vunpack.c.l.b16 %v1208
    %v1572 = vunpack.c.h.b16 %v1208
    %v1573 = vunpack.c.l.b16 %v1209
    %v1574 = vunpack.c.h.b16 %v1209
    %v1575 = vunpack.c.l.b16 %v1210
    %v1576 = vunpack.c.h.b16 %v1210
    %v1577 = vunpack.c.l.b16 %v1211
    %v1578 = vunpack.c.h.b16 %v1211
    %v1579 = vunpack.c.l.b16 %v1212
    %v1580 = vunpack.c.h.b16 %v1212
    %v1581 = vunpack.c.l.b16 %v1213
    %v1582 = vunpack.c.h.b16 %v1213
    %v1583 = vunpack.c.l.b16 %v1214
    %v1584 = vunpack.c.h.b16 %v1214
    %v1585 = vunpack.c.l.b16 %v1215
    %v1586 = vunpack.c.h.b16 %v1215
    %v1587 = vunpack.c.l.b16 %v1216
    %v1588 = vunpack.c.h.b16 %v1216
    %v1589 = vunpack.c.l.b16 %v1217
    %v1590 = vunpack.c.h.b16 %v1217
    %v1591 = vunpack.c.l.b16 %v1218
    %v1592 = vunpack.c.h.b16 %v1218
    %v1593 = vunpack.c.l.b16 %v1219
    %v1594 = vunpack.c.h.b16 %v1219
    %v1595 = vunpack.c.l.b16 %v1220
    %v1596 = vunpack.c.h.b16 %v1220
    %v1597 = vunpack.c.l.b16 %v1221
    %v1598 = vunpack.c.h.b16 %v1221
    %v1599 = vunpack.c.l.b16 %v1222
    %v1600 = vunpack.c.h.b16 %v1222
    %v1601 = vunpack.c.l.b16 %v1223
    %v1602 = vunpack.c.h.b16 %v1223
    %v1603 = vunpack.c.l.b16 %v1224
    %v1604 = vunpack.c.h.b16 %v1224
    %v1605 = vunpack.c.l.b16 %v1225
    %v1606 = vunpack.c.h.b16 %v1225
    %v1607 = vunpack.c.l.b16 %v1226
    %v1608 = vunpack.c.h.b16 %v1226
    %v1609 = vunpack.c.l.b16 %v1227
    %v1610 = vunpack.c.h.b16 %v1227
    %v1611 = vunpack.c.l.b16 %v1228
    %v1612 = vunpack.c.h.b16 %v1228
    %v1613 = vpack.c.b16 %v1365, %v1357
    %v1614 = vpack.c.b16 %v1366, %v1358
    %v1615 = vpack.c.b16 %v1367, %v1359
    %v1616 = vpack.c.b16 %v1368, %v1360
    %v1617 = vpack.c.b16 %v1369, %v1361
    %v1618 = vpack.c.b16 %v1370, %v1362
    %v1619 = vpack.c.b16 %v1371, %v1363
    %v1620 = vpack.c.b16 %v1372, %v1364
    %v1621 = vpack.c.b16 %v1381, %v1373
    %v1622 = vpack.c.b16 %v1382, %v1374
    %v1623 = vpack.c.b16 %v1383, %v1375
    %v1624 = vpack.c.b16 %v1384, %v1376
    %v1625 = vpack.c.b16 %v1385, %v1377
    %v1626 = vpack.c.b16 %v1386, %v1378
    %v1627 = vpack.c.b16 %v1387, %v1379
    %v1628 = vpack.c.b16 %v1388, %v1380
    %v1629 = vpack.c.b16 %v1397, %v1389
    %v1630 = vpack.c.b16 %v1398, %v1390
    %v1631 = vpack.c.b16 %v1399, %v1391
    %v1632 = vpack.c.b16 %v1400, %v1392
    %v1633 = vpack.c.b16 %v1401, %v1393
    %v1634 = vpack.c.b16 %v1402, %v1394
    %v1635 = vpack.c.b16 %v1403, %v1395
    %v1636 = vpack.c.b16 %v1404, %v1396
    %v1637 = vpack.c.b16 %v1413, %v1405
    %v1638 = vpack.c.b16 %v1414, %v1406
    %v1639 = vpack.c.b16 %v1415, %v1407
    %v1640 = vpack.c.b16 %v1416, %v1408
    %v1641 = vpack.c.b16 %v1417, %v1409
    %v1642 = vpack.c.b16 %v1418, %v1410
    %v1643 = vpack.c.b16 %v1419, %v1411
    %v1644 = vpack.c.b16 %v1420, %v1412
    %v1645 = vpack.c.b16 %v1429, %v1421
    %v1646 = vpack.c.b16 %v1430, %v1422
    %v1647 = vpack.c.b16 %v1431, %v1423
    %v1648 = vpack.c.b16 %v1432, %v1424
    %v1649 = vpack.c.b16 %v1433, %v1425
    %v1650 = vpack.c.b16 %v1434, %v1426
    %v1651 = vpack.c.b16 %v1435, %v1427
    %v1652 = vpack.c.b16 %v1436, %v1428
    %v1653 = vpack.c.b16 %v1445, %v1437
    %v1654 = vpack.c.b16 %v1446, %v1438
    %v1655 = vpack.c.b16 %v1447, %v1439
    %v1656 = vpack.c.b16 %v1448, %v1440
    %v1657 = vpack.c.b16 %v1449, %v1441
    %v1658 = vpack.c.b16 %v1450, %v1442
    %v1659 = vpack.c.b16 %v1451, %v1443
    %v1660 = vpack.c.b16 %v1452, %v1444
    %v1661 = vpack.c.b16 %v1461, %v1453
    %v1662 = vpack.c.b16 %v1462, %v1454
    %v1663 = vpack.c.b16 %v1463, %v1455
    %v1664 = vpack.c.b16 %v1464, %v1456
    %v1665 = vpack.c.b16 %v1465, %v1457
    %v1666 = vpack.c.b16 %v1466, %v1458
    %v1667 = vpack.c.b16 %v1467, %v1459
    %v1668 = vpack.c.b16 %v1468, %v1460
    %v1669 = vpack.c.b16 %v1477, %v1469
    %v1670 = vpack.c.b16 %v1478, %v1470
    %v1671 = vpack.c.b16 %v1479, %v1471
    %v1672 = vpack.c.b16 %v1480, %v1472
    %v1673 = vpack.c.b16 %v1481, %v1473
    %v1674 = vpack.c.b16 %v1482, %v1474
    %v1675 = vpack.c.b16 %v1483, %v1475
    %v1676 = vpack.c.b16 %v1484, %v1476
    %v1677 = vpack.c.b16 %v1493, %v1485
    %v1678 = vpack.c.b16 %v1494, %v1486
    %v1679 = vpack.c.b16 %v1495, %v1487
    %v1680 = vpack.c.b16 %v1496, %v1488
    %v1681 = vpack.c.b16 %v1497, %v1489
    %v1682 = vpack.c.b16 %v1498, %v1490
    %v1683 = vpack.c.b16 %v1499, %v1491
    %v1684 = vpack.c.b16 %v1500, %v1492
    %v1685 = vpack.c.b16 %v1509, %v1501
    %v1686 = vpack.c.b16 %v1510, %v1502
    %v1687 = vpack.c.b16 %v1511, %v1503
    %v1688 = vpack.c.b16 %v1512, %v1504
    %v1689 = vpack.c.b16 %v1513, %v1505
    %v1690 = vpack.c.b16 %v1514, %v1506
    %v1691 = vpack.c.b16 %v1515, %v1507
    %v1692 = vpack.c.b16 %v1516, %v1508
    %v1693 = vpack.c.b16 %v1525, %v1517
    %v1694 = vpack.c.b16 %v1526, %v1518
    %v1695 = vpack.c.b16 %v1527, %v1519
    %v1696 = vpack.c.b16 %v1528, %v1520
    %v1697 = vpack.c.b16 %v1529, %v1521
    %v1698 = vpack.c.b16 %v1530, %v1522
    %v1699 = vpack.c.b16 %v1531, %v1523
    %v1700 = vpack.c.b16 %v1532, %v1524
    %v1701 = vpack.c.b16 %v1541, %v1533
    %v1702 = vpack.c.b16 %v1542, %v1534
    %v1703 = vpack.c.b16 %v1543, %v1535
    %v1704 = vpack.c.b16 %v1544, %v1536
    %v1705 = vpack.c.b16 %v1545, %v1537
    %v1706 = vpack.c.b16 %v1546, %v1538
    %v1707 = vpack.c.b16 %v1547, %v1539
    %v1708 = vpack.c.b16 %v1548, %v1540
    %v1709 = vpack.c.b16 %v1557, %v1549
    %v1710 = vpack.c.b16 %v1558, %v1550
    %v1711 = vpack.c.b16 %v1559, %v1551
    %v1712 = vpack.c.b16 %v1560, %v1552
    %v1713 = vpack.c.b16 %v1561, %v1553
    %v1714 = vpack.c.b16 %v1562, %v1554
    %v1715 = vpack.c.b16 %v1563, %v1555
    %v1716 = vpack.c.b16 %v1564, %v1556
    %v1717 = vpack.c.b16 %v1573, %v1565
    %v1718 = vpack.c.b16 %v1574, %v1566
    %v1719 = vpack.c.b16 %v1575, %v1567
    %v1720 = vpack.c.b16 %v1576, %v1568
    %v1721 = vpack.c.b16 %v1577, %v1569
    %v1722 = vpack.c.b16 %v1578, %v1570
    %v1723 = vpack.c.b16 %v1579, %v1571
    %v1724 = vpack.c.b16 %v1580, %v1572
    %v1725 = vpack.c.b16 %v1589, %v1581
    %v1726 = vpack.c.b16 %v1590, %v1582
    %v1727 = vpack.c.b16 %v1591, %v1583
    %v1728 = vpack.c.b16 %v1592, %v1584
    %v1729 = vpack.c.b16 %v1593, %v1585
    %v1730 = vpack.c.b16 %v1594, %v1586
    %v1731 = vpack.c.b16 %v1595, %v1587
    %v1732 = vpack.c.b16 %v1596, %v1588
    %v1733 = vpack.c.b16 %v1605, %v1597
    %v1734 = vpack.c.b16 %v1606, %v1598
    %v1735 = vpack.c.b16 %v1607, %v1599
    %v1736 = vpack.c.b16 %v1608, %v1600
    %v1737 = vpack.c.b16 %v1609, %v1601
    %v1738 = vpack.c.b16 %v1610, %v1602
    %v1739 = vpack.c.b16 %v1611, %v1603
    %v1740 = vpack.c.b16 %v1612, %v1604
    %1869 = vmatprep.subr.bf16.mxu0 %v1670
    %1870 = vmatpush1.bf16.msra.mxu0 %v1669
    %1871 = vmatprep.subr.bf16.mxu0 %v1662
    %1872 = vmatpush1.bf16.msra.mxu0 %v1661
    %1873 = vmatprep.subr.bf16.mxu0 %v1654
    %1874 = vmatpush1.bf16.msra.mxu0 %v1653
    %1875 = vmatprep.subr.bf16.mxu0 %v1646
    %1876 = vmatpush1.bf16.msra.mxu0 %v1645
    %1877 = vmatprep.subr.bf16.mxu0 %v1638
    %1878 = vmatpush1.bf16.msra.mxu0 %v1637
    %1879 = vmatprep.subr.bf16.mxu0 %v1630
    %1880 = vmatpush1.bf16.msra.mxu0 %v1629
    %1881 = vmatprep.subr.bf16.mxu0 %v1622
    %1882 = vmatpush1.bf16.msra.mxu0 %v1621
    %1883 = vmatprep.subr.bf16.mxu0 %v1614
    %1884 = vmatpush1.bf16.msra.mxu0 %v1613
    %1885 = vmatprep.subr.bf16.mxu0 %v1734
    %1886 = vmatpush2.bf16.msra.mxu0 %v1733
    %1887 = vmatprep.subr.bf16.mxu0 %v1726
    %1888 = vmatpush2.bf16.msra.mxu0 %v1725
    %1889 = vmatprep.subr.bf16.mxu0 %v1718
    %1890 = vmatpush2.bf16.msra.mxu0 %v1717
    %1891 = vmatprep.subr.bf16.mxu0 %v1710
    %1892 = vmatpush2.bf16.msra.mxu0 %v1709
    %1893 = vmatprep.subr.bf16.mxu0 %v1702
    %1894 = vmatpush2.bf16.msra.mxu0 %v1701
    %1895 = vmatprep.subr.bf16.mxu0 %v1694
    %1896 = vmatpush2.bf16.msra.mxu0 %v1693
    %1897 = vmatprep.subr.bf16.mxu0 %v1686
    %1898 = vmatpush2.bf16.msra.mxu0 %v1685
    %1899 = vmatprep.subr.bf16.mxu0 %v1678
    %1900 = vmatpush2.bf16.msra.mxu0 %v1677
    %1901 = vmatprep.mubr.bf16.mxu0 %v1100
    %1902 = vmatmul.mubr.bf16.gmra.mxu0 %v1099
    %v1903 = vpop.f32.mrf.mxu0
    %v1904 = vadd.f32 0.0, %v1903
    %v1905 = vpop.f32.mrf.mxu0
    %v1906 = vadd.f32 0.0, %v1905
    %v1907 = vpop.f32.mrf.mxu0
    %v1908 = vpop.f32.mrf.mxu0
    %1909 = vdwg.mxu0
    %1910 = vmatprep.subr.bf16.mxu0 %v1672
    %1911 = vmatpush1.bf16.msra.mxu0 %v1671
    %1912 = vmatprep.subr.bf16.mxu0 %v1664
    %1913 = vmatpush1.bf16.msra.mxu0 %v1663
    %1914 = vmatprep.subr.bf16.mxu0 %v1656
    %1915 = vmatpush1.bf16.msra.mxu0 %v1655
    %1916 = vmatprep.subr.bf16.mxu0 %v1648
    %1917 = vmatpush1.bf16.msra.mxu0 %v1647
    %1918 = vmatprep.subr.bf16.mxu0 %v1640
    %1919 = vmatpush1.bf16.msra.mxu0 %v1639
    %1920 = vmatprep.subr.bf16.mxu0 %v1632
    %1921 = vmatpush1.bf16.msra.mxu0 %v1631
    %1922 = vmatprep.subr.bf16.mxu0 %v1624
    %1923 = vmatpush1.bf16.msra.mxu0 %v1623
    %1924 = vmatprep.subr.bf16.mxu0 %v1616
    %1925 = vmatpush1.bf16.msra.mxu0 %v1615
    %1926 = vmatprep.subr.bf16.mxu0 %v1736
    %1927 = vmatpush2.bf16.msra.mxu0 %v1735
    %1928 = vmatprep.subr.bf16.mxu0 %v1728
    %1929 = vmatpush2.bf16.msra.mxu0 %v1727
    %1930 = vmatprep.subr.bf16.mxu0 %v1720
    %1931 = vmatpush2.bf16.msra.mxu0 %v1719
    %1932 = vmatprep.subr.bf16.mxu0 %v1712
    %1933 = vmatpush2.bf16.msra.mxu0 %v1711
    %1934 = vmatprep.subr.bf16.mxu0 %v1704
    %1935 = vmatpush2.bf16.msra.mxu0 %v1703
    %1936 = vmatprep.subr.bf16.mxu0 %v1696
    %1937 = vmatpush2.bf16.msra.mxu0 %v1695
    %1938 = vmatprep.subr.bf16.mxu0 %v1688
    %1939 = vmatpush2.bf16.msra.mxu0 %v1687
    %1940 = vmatprep.subr.bf16.mxu0 %v1680
    %1941 = vmatpush2.bf16.msra.mxu0 %v1679
    %1942 = vmatprep.mubr.bf16.mxu0 %v1100
    %1943 = vmatmul.mubr.bf16.gmra.mxu0 %v1099
    %v1944 = vpop.f32.mrf.mxu0
    %v1945 = vadd.f32 0.0, %v1944
    %v1946 = vpop.f32.mrf.mxu0
    %v1947 = vadd.f32 0.0, %v1946
    %v1948 = vpop.f32.mrf.mxu0
    %v1949 = vpop.f32.mrf.mxu0
    %1950 = vdwg.mxu0
    %1951 = vmatprep.subr.bf16.mxu0 %v1674
    %1952 = vmatpush1.bf16.msra.mxu0 %v1673
    %1953 = vmatprep.subr.bf16.mxu0 %v1666
    %1954 = vmatpush1.bf16.msra.mxu0 %v1665
    %1955 = vmatprep.subr.bf16.mxu0 %v1658
    %1956 = vmatpush1.bf16.msra.mxu0 %v1657
    %1957 = vmatprep.subr.bf16.mxu0 %v1650
    %1958 = vmatpush1.bf16.msra.mxu0 %v1649
    %1959 = vmatprep.subr.bf16.mxu0 %v1642
    %1960 = vmatpush1.bf16.msra.mxu0 %v1641
    %1961 = vmatprep.subr.bf16.mxu0 %v1634
    %1962 = vmatpush1.bf16.msra.mxu0 %v1633
    %1963 = vmatprep.subr.bf16.mxu0 %v1626
    %1964 = vmatpush1.bf16.msra.mxu0 %v1625
    %1965 = vmatprep.subr.bf16.mxu0 %v1618
    %1966 = vmatpush1.bf16.msra.mxu0 %v1617
    %1967 = vmatprep.subr.bf16.mxu0 %v1738
    %1968 = vmatpush2.bf16.msra.mxu0 %v1737
    %1969 = vmatprep.subr.bf16.mxu0 %v1730
    %1970 = vmatpush2.bf16.msra.mxu0 %v1729
    %1971 = vmatprep.subr.bf16.mxu0 %v1722
    %1972 = vmatpush2.bf16.msra.mxu0 %v1721
    %1973 = vmatprep.subr.bf16.mxu0 %v1714
    %1974 = vmatpush2.bf16.msra.mxu0 %v1713
    %1975 = vmatprep.subr.bf16.mxu0 %v1706
    %1976 = vmatpush2.bf16.msra.mxu0 %v1705
    %1977 = vmatprep.subr.bf16.mxu0 %v1698
    %1978 = vmatpush2.bf16.msra.mxu0 %v1697
    %1979 = vmatprep.subr.bf16.mxu0 %v1690
    %1980 = vmatpush2.bf16.msra.mxu0 %v1689
    %1981 = vmatprep.subr.bf16.mxu0 %v1682
    %1982 = vmatpush2.bf16.msra.mxu0 %v1681
    %1983 = vmatprep.mubr.bf16.mxu0 %v1100
    %1984 = vmatmul.mubr.bf16.gmra.mxu0 %v1099
    %v1985 = vpop.f32.mrf.mxu0
    %v1986 = vadd.f32 0.0, %v1985
    %v1987 = vpop.f32.mrf.mxu0
    %v1988 = vadd.f32 0.0, %v1987
    %v1989 = vpop.f32.mrf.mxu0
    %v1990 = vpop.f32.mrf.mxu0
    %1991 = vdwg.mxu0
    %1992 = vmatprep.subr.bf16.mxu0 %v1676
    %1993 = vmatpush1.bf16.msra.mxu0 %v1675
    %1994 = vmatprep.subr.bf16.mxu0 %v1668
    %1995 = vmatpush1.bf16.msra.mxu0 %v1667
    %1996 = vmatprep.subr.bf16.mxu0 %v1660
    %1997 = vmatpush1.bf16.msra.mxu0 %v1659
    %1998 = vmatprep.subr.bf16.mxu0 %v1652
    %1999 = vmatpush1.bf16.msra.mxu0 %v1651
    %2000 = vmatprep.subr.bf16.mxu0 %v1644
    %2001 = vmatpush1.bf16.msra.mxu0 %v1643
    %2002 = vmatprep.subr.bf16.mxu0 %v1636
    %2003 = vmatpush1.bf16.msra.mxu0 %v1635
    %2004 = vmatprep.subr.bf16.mxu0 %v1628
    %2005 = vmatpush1.bf16.msra.mxu0 %v1627
    %2006 = vmatprep.subr.bf16.mxu0 %v1620
    %2007 = vmatpush1.bf16.msra.mxu0 %v1619
    %2008 = vmatprep.subr.bf16.mxu0 %v1740
    %2009 = vmatpush2.bf16.msra.mxu0 %v1739
    %2010 = vmatprep.subr.bf16.mxu0 %v1732
    %2011 = vmatpush2.bf16.msra.mxu0 %v1731
    %2012 = vmatprep.subr.bf16.mxu0 %v1724
    %2013 = vmatpush2.bf16.msra.mxu0 %v1723
    %2014 = vmatprep.subr.bf16.mxu0 %v1716
    %2015 = vmatpush2.bf16.msra.mxu0 %v1715
    %2016 = vmatprep.subr.bf16.mxu0 %v1708
    %2017 = vmatpush2.bf16.msra.mxu0 %v1707
    %2018 = vmatprep.subr.bf16.mxu0 %v1700
    %2019 = vmatpush2.bf16.msra.mxu0 %v1699
    %2020 = vmatprep.subr.bf16.mxu0 %v1692
    %2021 = vmatpush2.bf16.msra.mxu0 %v1691
    %2022 = vmatprep.subr.bf16.mxu0 %v1684
    %2023 = vmatpush2.bf16.msra.mxu0 %v1683
    %2024 = vmatprep.mubr.bf16.mxu0 %v1100
    %2025 = vmatmul.mubr.bf16.gmra.mxu0 %v1099
    %v2026 = vpop.f32.mrf.mxu0
    %v2027 = vadd.f32 0.0, %v2026
    %v2028 = vpop.f32.mrf.mxu0
    %v2029 = vadd.f32 0.0, %v2028
    %v2030 = vpop.f32.mrf.mxu0
    %v2031 = vpop.f32.mrf.mxu0
    %2032 = vdwg.mxu0
    %v2034 = vlaneseq
    %v2035 = vshrl.u32 %v2034, 7
    %v2036 = vsub.s32 0, %v2035
    %v2037 = vrot.slane %v1096, %v2036
    %v2038 = vlaneseq
    %v2039 = vshrl.u32 %v2038, 7
    %v2040 = vsub.s32 1, %v2039
    %v2041 = vrot.slane %v1096, %v2040
    %v2042 = vlaneseq
    %v2043 = vshrl.u32 %v2042, 7
    %v2044 = vsub.s32 2, %v2043
    %v2045 = vrot.slane %v1096, %v2044
    %v2046 = vlaneseq
    %v2047 = vshrl.u32 %v2046, 7
    %v2048 = vsub.s32 3, %v2047
    %v2049 = vrot.slane %v1096, %v2048
    %v2050 = vlaneseq
    %v2051 = vshrl.u32 %v2050, 7
    %v2052 = vsub.s32 4, %v2051
    %v2053 = vrot.slane %v1096, %v2052
    %v2054 = vlaneseq
    %v2055 = vshrl.u32 %v2054, 7
    %v2056 = vsub.s32 5, %v2055
    %v2057 = vrot.slane %v1096, %v2056
    %v2058 = vlaneseq
    %v2059 = vshrl.u32 %v2058, 7
    %v2060 = vsub.s32 6, %v2059
    %v2061 = vrot.slane %v1096, %v2060
    %v2062 = vlaneseq
    %v2063 = vshrl.u32 %v2062, 7
    %v2064 = vsub.s32 7, %v2063
    %v2065 = vrot.slane %v1096, %v2064
    %v2074 = vadd.f32 %v2037, %v1904
    %v2075 = vadd.f32 %v2041, %v1906
    %v2076 = vadd.f32 %v2045, %v1945
    %v2077 = vadd.f32 %v2049, %v1947
    %v2078 = vadd.f32 %v2053, %v1986
    %v2079 = vadd.f32 %v2057, %v1988
    %v2080 = vadd.f32 %v2061, %v2027
    %v2081 = vadd.f32 %v2065, %v2029
    %v2082 = vld [vmem:[#allocation3] sm:$0xff]
    %v2083 = vld [vmem:[#allocation3 + $0x8] sm:$0xff]
    %v2084 = vxor.u32 %v2074, 2147483648
    %v2085 = vxor.u32 %v2075, 2147483648
    %v2086 = vmul.f32 %v2084, 1.442695
    %v2087 = vpow.pop %v2086
    %v2088 = vmul.f32 %v2085, 1.442695
    %v2089 = vpow.pop %v2088
    %v2090 = vadd.f32 %v2087, 1.0
    %v2091 = vadd.f32 %v2089, 1.0
    %v2092 = vrcp.pop %v2090
    %v2093 = vmul.f32 1.0, %v2092
    %v2094 = vrcp.pop %v2091
    %v2095 = vmul.f32 1.0, %v2094
    %v2096 = vxor.u32 %v2076, 2147483648
    %v2097 = vxor.u32 %v2077, 2147483648
    %v2098 = vmul.f32 %v2096, 1.442695
    %v2099 = vpow.pop %v2098
    %v2100 = vmul.f32 %v2097, 1.442695
    %v2101 = vpow.pop %v2100
    %v2102 = vadd.f32 %v2099, 1.0
    %v2103 = vadd.f32 %v2101, 1.0
    %v2104 = vrcp.pop %v2102
    %v2105 = vmul.f32 1.0, %v2104
    %v2106 = vrcp.pop %v2103
    %v2107 = vmul.f32 1.0, %v2106
    %v2108 = vtanh.pop %v2078
    %v2109 = vtanh.pop %v2079
    %v2110 = vxor.u32 %v2080, 2147483648
    %v2111 = vxor.u32 %v2081, 2147483648
    %v2112 = vmul.f32 %v2110, 1.442695
    %v2113 = vpow.pop %v2112
    %v2114 = vmul.f32 %v2111, 1.442695
    %v2115 = vpow.pop %v2114
    %v2116 = vadd.f32 %v2113, 1.0
    %v2117 = vadd.f32 %v2115, 1.0
    %v2118 = vrcp.pop %v2116
    %v2119 = vmul.f32 1.0, %v2118
    %v2120 = vrcp.pop %v2117
    %v2121 = vmul.f32 1.0, %v2120
    %v2122 = vmul.f32 %v2105, %v2082
    %v2123 = vmul.f32 %v2107, %v2083
    %v2124 = vmul.f32 %v2093, %v2108
    %v2125 = vmul.f32 %v2095, %v2109
    %v2126 = vadd.f32 %v2122, %v2124
    %v2127 = vadd.f32 %v2123, %v2125
    %v2128 = vtanh.pop %v2126
    %v2129 = vtanh.pop %v2127
    %v2130 = vmul.f32 %v2119, %v2128
    %v2131 = vmul.f32 %v2121, %v2129
    %v2132 = vxor.u32 %v2130, 2147483648
    %v2133 = vxor.u32 %v2131, 2147483648
    %v2134 = vmul.f32 %v2132, 1.442695
    %v2135 = vpow.pop %v2134
    %v2136 = vmul.f32 %v2133, 1.442695
    %v2137 = vpow.pop %v2136
    %v2138 = vadd.f32 %v2135, 1.0
    %v2139 = vadd.f32 %v2137, 1.0
    %v2140 = vrcp.pop %v2138
    %v2141 = vmul.f32 1.0, %v2140
    %v2142 = vrcp.pop %v2139
    %v2143 = vmul.f32 1.0, %v2142
    %2144 = vst [vmem:[#allocation2] sm:$0xff] %v2141
    %2145 = vst [vmem:[#allocation2 + $0x8] sm:$0xff] %v2143
    %2146 = vst [vmem:[#allocation3] sm:$0xff] %v2126
    %2147 = vst [vmem:[#allocation3 + $0x8] sm:$0xff] %v2127
    %2148 = vst [vmem:[#allocation12] sm:$0xff] %v2141
    %2149 = vst [vmem:[#allocation12 + $0x8] sm:$0xff] %v2143
    loop: start=1, step=1, limit=4
    $region41: #{tpu_custom_call.1} parent=1 // loop_pre_header
      _
    $region42: #{tpu_custom_call.1} parent=1 // loop_header
      %s2151 = sphi 1, %s2155
      %p2152 = scmp.ge.s32.totalorder %s2151, 4
    $region43: #{tpu_custom_call.1} parent=1 // loop_header_branch
      %2154 = sbr.rel (%p2152) target = $region47
    $region44: #{tpu_custom_call.1} parent=1 // loop_body
      %v2156 = vld [vmem:[#allocation10] sm:$0xff]
      %v2157 = vld [vmem:[#allocation2] sm:$0xff]
      %v2158 = vld [vmem:[#allocation2 + $0x8] sm:$0xff]
      %v2159 = vpack.c.bf16 %v2157, %v2157
      %v2160 = vpack.c.bf16 %v2158, %v2158
      %v2161 = vld [vmem:[#allocation9] sm:$0xff]
      %v2162 = vld [vmem:[#allocation9 + $0x8] sm:$0xff]
      %v2163 = vld [vmem:[#allocation9 + $0x10] sm:$0xff]
      %v2164 = vld [vmem:[#allocation9 + $0x18] sm:$0xff]
      %v2165 = vld [vmem:[#allocation9 + $0x20] sm:$0xff]
      %v2166 = vld [vmem:[#allocation9 + $0x28] sm:$0xff]
      %v2167 = vld [vmem:[#allocation9 + $0x30] sm:$0xff]
      %v2168 = vld [vmem:[#allocation9 + $0x38] sm:$0xff]
      %v2169 = vld [vmem:[#allocation9 + $0x40] sm:$0xff]
      %v2170 = vld [vmem:[#allocation9 + $0x48] sm:$0xff]
      %v2171 = vld [vmem:[#allocation9 + $0x50] sm:$0xff]
      %v2172 = vld [vmem:[#allocation9 + $0x58] sm:$0xff]
      %v2173 = vld [vmem:[#allocation9 + $0x60] sm:$0xff]
      %v2174 = vld [vmem:[#allocation9 + $0x68] sm:$0xff]
      %v2175 = vld [vmem:[#allocation9 + $0x70] sm:$0xff]
      %v2176 = vld [vmem:[#allocation9 + $0x78] sm:$0xff]
      %v2177 = vld [vmem:[#allocation9 + $0x80] sm:$0xff]
      %v2178 = vld [vmem:[#allocation9 + $0x88] sm:$0xff]
      %v2179 = vld [vmem:[#allocation9 + $0x90] sm:$0xff]
      %v2180 = vld [vmem:[#allocation9 + $0x98] sm:$0xff]
      %v2181 = vld [vmem:[#allocation9 + $0xa0] sm:$0xff]
      %v2182 = vld [vmem:[#allocation9 + $0xa8] sm:$0xff]
      %v2183 = vld [vmem:[#allocation9 + $0xb0] sm:$0xff]
      %v2184 = vld [vmem:[#allocation9 + $0xb8] sm:$0xff]
      %v2185 = vld [vmem:[#allocation9 + $0xc0] sm:$0xff]
      %v2186 = vld [vmem:[#allocation9 + $0xc8] sm:$0xff]
      %v2187 = vld [vmem:[#allocation9 + $0xd0] sm:$0xff]
      %v2188 = vld [vmem:[#allocation9 + $0xd8] sm:$0xff]
      %v2189 = vld [vmem:[#allocation9 + $0xe0] sm:$0xff]
      %v2190 = vld [vmem:[#allocation9 + $0xe8] sm:$0xff]
      %v2191 = vld [vmem:[#allocation9 + $0xf0] sm:$0xff]
      %v2192 = vld [vmem:[#allocation9 + $0xf8] sm:$0xff]
      %v2193 = vld [vmem:[#allocation9 + $0x100] sm:$0xff]
      %v2194 = vld [vmem:[#allocation9 + $0x108] sm:$0xff]
      %v2195 = vld [vmem:[#allocation9 + $0x110] sm:$0xff]
      %v2196 = vld [vmem:[#allocation9 + $0x118] sm:$0xff]
      %v2197 = vld [vmem:[#allocation9 + $0x120] sm:$0xff]
      %v2198 = vld [vmem:[#allocation9 + $0x128] sm:$0xff]
      %v2199 = vld [vmem:[#allocation9 + $0x130] sm:$0xff]
      %v2200 = vld [vmem:[#allocation9 + $0x138] sm:$0xff]
      %v2201 = vld [vmem:[#allocation9 + $0x140] sm:$0xff]
      %v2202 = vld [vmem:[#allocation9 + $0x148] sm:$0xff]
      %v2203 = vld [vmem:[#allocation9 + $0x150] sm:$0xff]
      %v2204 = vld [vmem:[#allocation9 + $0x158] sm:$0xff]
      %v2205 = vld [vmem:[#allocation9 + $0x160] sm:$0xff]
      %v2206 = vld [vmem:[#allocation9 + $0x168] sm:$0xff]
      %v2207 = vld [vmem:[#allocation9 + $0x170] sm:$0xff]
      %v2208 = vld [vmem:[#allocation9 + $0x178] sm:$0xff]
      %v2209 = vld [vmem:[#allocation9 + $0x180] sm:$0xff]
      %v2210 = vld [vmem:[#allocation9 + $0x188] sm:$0xff]
      %v2211 = vld [vmem:[#allocation9 + $0x190] sm:$0xff]
      %v2212 = vld [vmem:[#allocation9 + $0x198] sm:$0xff]
      %v2213 = vld [vmem:[#allocation9 + $0x1a0] sm:$0xff]
      %v2214 = vld [vmem:[#allocation9 + $0x1a8] sm:$0xff]
      %v2215 = vld [vmem:[#allocation9 + $0x1b0] sm:$0xff]
      %v2216 = vld [vmem:[#allocation9 + $0x1b8] sm:$0xff]
      %v2217 = vld [vmem:[#allocation9 + $0x1c0] sm:$0xff]
      %v2218 = vld [vmem:[#allocation9 + $0x1c8] sm:$0xff]
      %v2219 = vld [vmem:[#allocation9 + $0x1d0] sm:$0xff]
      %v2220 = vld [vmem:[#allocation9 + $0x1d8] sm:$0xff]
      %v2221 = vld [vmem:[#allocation9 + $0x1e0] sm:$0xff]
      %v2222 = vld [vmem:[#allocation9 + $0x1e8] sm:$0xff]
      %v2223 = vld [vmem:[#allocation9 + $0x1f0] sm:$0xff]
      %v2224 = vld [vmem:[#allocation9 + $0x1f8] sm:$0xff]
      %v2225 = vld [vmem:[#allocation9 + $0x200] sm:$0xff]
      %v2226 = vld [vmem:[#allocation9 + $0x208] sm:$0xff]
      %v2227 = vld [vmem:[#allocation9 + $0x210] sm:$0xff]
      %v2228 = vld [vmem:[#allocation9 + $0x218] sm:$0xff]
      %v2229 = vld [vmem:[#allocation9 + $0x220] sm:$0xff]
      %v2230 = vld [vmem:[#allocation9 + $0x228] sm:$0xff]
      %v2231 = vld [vmem:[#allocation9 + $0x230] sm:$0xff]
      %v2232 = vld [vmem:[#allocation9 + $0x238] sm:$0xff]
      %v2233 = vld [vmem:[#allocation9 + $0x240] sm:$0xff]
      %v2234 = vld [vmem:[#allocation9 + $0x248] sm:$0xff]
      %v2235 = vld [vmem:[#allocation9 + $0x250] sm:$0xff]
      %v2236 = vld [vmem:[#allocation9 + $0x258] sm:$0xff]
      %v2237 = vld [vmem:[#allocation9 + $0x260] sm:$0xff]
      %v2238 = vld [vmem:[#allocation9 + $0x268] sm:$0xff]
      %v2239 = vld [vmem:[#allocation9 + $0x270] sm:$0xff]
      %v2240 = vld [vmem:[#allocation9 + $0x278] sm:$0xff]
      %v2241 = vld [vmem:[#allocation9 + $0x280] sm:$0xff]
      %v2242 = vld [vmem:[#allocation9 + $0x288] sm:$0xff]
      %v2243 = vld [vmem:[#allocation9 + $0x290] sm:$0xff]
      %v2244 = vld [vmem:[#allocation9 + $0x298] sm:$0xff]
      %v2245 = vld [vmem:[#allocation9 + $0x2a0] sm:$0xff]
      %v2246 = vld [vmem:[#allocation9 + $0x2a8] sm:$0xff]
      %v2247 = vld [vmem:[#allocation9 + $0x2b0] sm:$0xff]
      %v2248 = vld [vmem:[#allocation9 + $0x2b8] sm:$0xff]
      %v2249 = vld [vmem:[#allocation9 + $0x2c0] sm:$0xff]
      %v2250 = vld [vmem:[#allocation9 + $0x2c8] sm:$0xff]
      %v2251 = vld [vmem:[#allocation9 + $0x2d0] sm:$0xff]
      %v2252 = vld [vmem:[#allocation9 + $0x2d8] sm:$0xff]
      %v2253 = vld [vmem:[#allocation9 + $0x2e0] sm:$0xff]
      %v2254 = vld [vmem:[#allocation9 + $0x2e8] sm:$0xff]
      %v2255 = vld [vmem:[#allocation9 + $0x2f0] sm:$0xff]
      %v2256 = vld [vmem:[#allocation9 + $0x2f8] sm:$0xff]
      %v2257 = vld [vmem:[#allocation9 + $0x300] sm:$0xff]
      %v2258 = vld [vmem:[#allocation9 + $0x308] sm:$0xff]
      %v2259 = vld [vmem:[#allocation9 + $0x310] sm:$0xff]
      %v2260 = vld [vmem:[#allocation9 + $0x318] sm:$0xff]
      %v2261 = vld [vmem:[#allocation9 + $0x320] sm:$0xff]
      %v2262 = vld [vmem:[#allocation9 + $0x328] sm:$0xff]
      %v2263 = vld [vmem:[#allocation9 + $0x330] sm:$0xff]
      %v2264 = vld [vmem:[#allocation9 + $0x338] sm:$0xff]
      %v2265 = vld [vmem:[#allocation9 + $0x340] sm:$0xff]
      %v2266 = vld [vmem:[#allocation9 + $0x348] sm:$0xff]
      %v2267 = vld [vmem:[#allocation9 + $0x350] sm:$0xff]
      %v2268 = vld [vmem:[#allocation9 + $0x358] sm:$0xff]
      %v2269 = vld [vmem:[#allocation9 + $0x360] sm:$0xff]
      %v2270 = vld [vmem:[#allocation9 + $0x368] sm:$0xff]
      %v2271 = vld [vmem:[#allocation9 + $0x370] sm:$0xff]
      %v2272 = vld [vmem:[#allocation9 + $0x378] sm:$0xff]
      %v2273 = vld [vmem:[#allocation9 + $0x380] sm:$0xff]
      %v2274 = vld [vmem:[#allocation9 + $0x388] sm:$0xff]
      %v2275 = vld [vmem:[#allocation9 + $0x390] sm:$0xff]
      %v2276 = vld [vmem:[#allocation9 + $0x398] sm:$0xff]
      %v2277 = vld [vmem:[#allocation9 + $0x3a0] sm:$0xff]
      %v2278 = vld [vmem:[#allocation9 + $0x3a8] sm:$0xff]
      %v2279 = vld [vmem:[#allocation9 + $0x3b0] sm:$0xff]
      %v2280 = vld [vmem:[#allocation9 + $0x3b8] sm:$0xff]
      %v2281 = vld [vmem:[#allocation9 + $0x3c0] sm:$0xff]
      %v2282 = vld [vmem:[#allocation9 + $0x3c8] sm:$0xff]
      %v2283 = vld [vmem:[#allocation9 + $0x3d0] sm:$0xff]
      %v2284 = vld [vmem:[#allocation9 + $0x3d8] sm:$0xff]
      %v2285 = vld [vmem:[#allocation9 + $0x3e0] sm:$0xff]
      %v2286 = vld [vmem:[#allocation9 + $0x3e8] sm:$0xff]
      %v2287 = vld [vmem:[#allocation9 + $0x3f0] sm:$0xff]
      %v2288 = vld [vmem:[#allocation9 + $0x3f8] sm:$0xff]
      %v2417 = vunpack.c.l.b16 %v2161
      %v2418 = vunpack.c.h.b16 %v2161
      %v2419 = vunpack.c.l.b16 %v2162
      %v2420 = vunpack.c.h.b16 %v2162
      %v2421 = vunpack.c.l.b16 %v2163
      %v2422 = vunpack.c.h.b16 %v2163
      %v2423 = vunpack.c.l.b16 %v2164
      %v2424 = vunpack.c.h.b16 %v2164
      %v2425 = vunpack.c.l.b16 %v2165
      %v2426 = vunpack.c.h.b16 %v2165
      %v2427 = vunpack.c.l.b16 %v2166
      %v2428 = vunpack.c.h.b16 %v2166
      %v2429 = vunpack.c.l.b16 %v2167
      %v2430 = vunpack.c.h.b16 %v2167
      %v2431 = vunpack.c.l.b16 %v2168
      %v2432 = vunpack.c.h.b16 %v2168
      %v2433 = vunpack.c.l.b16 %v2169
      %v2434 = vunpack.c.h.b16 %v2169
      %v2435 = vunpack.c.l.b16 %v2170
      %v2436 = vunpack.c.h.b16 %v2170
      %v2437 = vunpack.c.l.b16 %v2171
      %v2438 = vunpack.c.h.b16 %v2171
      %v2439 = vunpack.c.l.b16 %v2172
      %v2440 = vunpack.c.h.b16 %v2172
      %v2441 = vunpack.c.l.b16 %v2173
      %v2442 = vunpack.c.h.b16 %v2173
      %v2443 = vunpack.c.l.b16 %v2174
      %v2444 = vunpack.c.h.b16 %v2174
      %v2445 = vunpack.c.l.b16 %v2175
      %v2446 = vunpack.c.h.b16 %v2175
      %v2447 = vunpack.c.l.b16 %v2176
      %v2448 = vunpack.c.h.b16 %v2176
      %v2449 = vunpack.c.l.b16 %v2177
      %v2450 = vunpack.c.h.b16 %v2177
      %v2451 = vunpack.c.l.b16 %v2178
      %v2452 = vunpack.c.h.b16 %v2178
      %v2453 = vunpack.c.l.b16 %v2179
      %v2454 = vunpack.c.h.b16 %v2179
      %v2455 = vunpack.c.l.b16 %v2180
      %v2456 = vunpack.c.h.b16 %v2180
      %v2457 = vunpack.c.l.b16 %v2181
      %v2458 = vunpack.c.h.b16 %v2181
      %v2459 = vunpack.c.l.b16 %v2182
      %v2460 = vunpack.c.h.b16 %v2182
      %v2461 = vunpack.c.l.b16 %v2183
      %v2462 = vunpack.c.h.b16 %v2183
      %v2463 = vunpack.c.l.b16 %v2184
      %v2464 = vunpack.c.h.b16 %v2184
      %v2465 = vunpack.c.l.b16 %v2185
      %v2466 = vunpack.c.h.b16 %v2185
      %v2467 = vunpack.c.l.b16 %v2186
      %v2468 = vunpack.c.h.b16 %v2186
      %v2469 = vunpack.c.l.b16 %v2187
      %v2470 = vunpack.c.h.b16 %v2187
      %v2471 = vunpack.c.l.b16 %v2188
      %v2472 = vunpack.c.h.b16 %v2188
      %v2473 = vunpack.c.l.b16 %v2189
      %v2474 = vunpack.c.h.b16 %v2189
      %v2475 = vunpack.c.l.b16 %v2190
      %v2476 = vunpack.c.h.b16 %v2190
      %v2477 = vunpack.c.l.b16 %v2191
      %v2478 = vunpack.c.h.b16 %v2191
      %v2479 = vunpack.c.l.b16 %v2192
      %v2480 = vunpack.c.h.b16 %v2192
      %v2481 = vunpack.c.l.b16 %v2193
      %v2482 = vunpack.c.h.b16 %v2193
      %v2483 = vunpack.c.l.b16 %v2194
      %v2484 = vunpack.c.h.b16 %v2194
      %v2485 = vunpack.c.l.b16 %v2195
      %v2486 = vunpack.c.h.b16 %v2195
      %v2487 = vunpack.c.l.b16 %v2196
      %v2488 = vunpack.c.h.b16 %v2196
      %v2489 = vunpack.c.l.b16 %v2197
      %v2490 = vunpack.c.h.b16 %v2197
      %v2491 = vunpack.c.l.b16 %v2198
      %v2492 = vunpack.c.h.b16 %v2198
      %v2493 = vunpack.c.l.b16 %v2199
      %v2494 = vunpack.c.h.b16 %v2199
      %v2495 = vunpack.c.l.b16 %v2200
      %v2496 = vunpack.c.h.b16 %v2200
      %v2497 = vunpack.c.l.b16 %v2201
      %v2498 = vunpack.c.h.b16 %v2201
      %v2499 = vunpack.c.l.b16 %v2202
      %v2500 = vunpack.c.h.b16 %v2202
      %v2501 = vunpack.c.l.b16 %v2203
      %v2502 = vunpack.c.h.b16 %v2203
      %v2503 = vunpack.c.l.b16 %v2204
      %v2504 = vunpack.c.h.b16 %v2204
      %v2505 = vunpack.c.l.b16 %v2205
      %v2506 = vunpack.c.h.b16 %v2205
      %v2507 = vunpack.c.l.b16 %v2206
      %v2508 = vunpack.c.h.b16 %v2206
      %v2509 = vunpack.c.l.b16 %v2207
      %v2510 = vunpack.c.h.b16 %v2207
      %v2511 = vunpack.c.l.b16 %v2208
      %v2512 = vunpack.c.h.b16 %v2208
      %v2513 = vunpack.c.l.b16 %v2209
      %v2514 = vunpack.c.h.b16 %v2209
      %v2515 = vunpack.c.l.b16 %v2210
      %v2516 = vunpack.c.h.b16 %v2210
      %v2517 = vunpack.c.l.b16 %v2211
      %v2518 = vunpack.c.h.b16 %v2211
      %v2519 = vunpack.c.l.b16 %v2212
      %v2520 = vunpack.c.h.b16 %v2212
      %v2521 = vunpack.c.l.b16 %v2213
      %v2522 = vunpack.c.h.b16 %v2213
      %v2523 = vunpack.c.l.b16 %v2214
      %v2524 = vunpack.c.h.b16 %v2214
      %v2525 = vunpack.c.l.b16 %v2215
      %v2526 = vunpack.c.h.b16 %v2215
      %v2527 = vunpack.c.l.b16 %v2216
      %v2528 = vunpack.c.h.b16 %v2216
      %v2529 = vunpack.c.l.b16 %v2217
      %v2530 = vunpack.c.h.b16 %v2217
      %v2531 = vunpack.c.l.b16 %v2218
      %v2532 = vunpack.c.h.b16 %v2218
      %v2533 = vunpack.c.l.b16 %v2219
      %v2534 = vunpack.c.h.b16 %v2219
      %v2535 = vunpack.c.l.b16 %v2220
      %v2536 = vunpack.c.h.b16 %v2220
      %v2537 = vunpack.c.l.b16 %v2221
      %v2538 = vunpack.c.h.b16 %v2221
      %v2539 = vunpack.c.l.b16 %v2222
      %v2540 = vunpack.c.h.b16 %v2222
      %v2541 = vunpack.c.l.b16 %v2223
      %v2542 = vunpack.c.h.b16 %v2223
      %v2543 = vunpack.c.l.b16 %v2224
      %v2544 = vunpack.c.h.b16 %v2224
      %v2545 = vunpack.c.l.b16 %v2225
      %v2546 = vunpack.c.h.b16 %v2225
      %v2547 = vunpack.c.l.b16 %v2226
      %v2548 = vunpack.c.h.b16 %v2226
      %v2549 = vunpack.c.l.b16 %v2227
      %v2550 = vunpack.c.h.b16 %v2227
      %v2551 = vunpack.c.l.b16 %v2228
      %v2552 = vunpack.c.h.b16 %v2228
      %v2553 = vunpack.c.l.b16 %v2229
      %v2554 = vunpack.c.h.b16 %v2229
      %v2555 = vunpack.c.l.b16 %v2230
      %v2556 = vunpack.c.h.b16 %v2230
      %v2557 = vunpack.c.l.b16 %v2231
      %v2558 = vunpack.c.h.b16 %v2231
      %v2559 = vunpack.c.l.b16 %v2232
      %v2560 = vunpack.c.h.b16 %v2232
      %v2561 = vunpack.c.l.b16 %v2233
      %v2562 = vunpack.c.h.b16 %v2233
      %v2563 = vunpack.c.l.b16 %v2234
      %v2564 = vunpack.c.h.b16 %v2234
      %v2565 = vunpack.c.l.b16 %v2235
      %v2566 = vunpack.c.h.b16 %v2235
      %v2567 = vunpack.c.l.b16 %v2236
      %v2568 = vunpack.c.h.b16 %v2236
      %v2569 = vunpack.c.l.b16 %v2237
      %v2570 = vunpack.c.h.b16 %v2237
      %v2571 = vunpack.c.l.b16 %v2238
      %v2572 = vunpack.c.h.b16 %v2238
      %v2573 = vunpack.c.l.b16 %v2239
      %v2574 = vunpack.c.h.b16 %v2239
      %v2575 = vunpack.c.l.b16 %v2240
      %v2576 = vunpack.c.h.b16 %v2240
      %v2577 = vunpack.c.l.b16 %v2241
      %v2578 = vunpack.c.h.b16 %v2241
      %v2579 = vunpack.c.l.b16 %v2242
      %v2580 = vunpack.c.h.b16 %v2242
      %v2581 = vunpack.c.l.b16 %v2243
      %v2582 = vunpack.c.h.b16 %v2243
      %v2583 = vunpack.c.l.b16 %v2244
      %v2584 = vunpack.c.h.b16 %v2244
      %v2585 = vunpack.c.l.b16 %v2245
      %v2586 = vunpack.c.h.b16 %v2245
      %v2587 = vunpack.c.l.b16 %v2246
      %v2588 = vunpack.c.h.b16 %v2246
      %v2589 = vunpack.c.l.b16 %v2247
      %v2590 = vunpack.c.h.b16 %v2247
      %v2591 = vunpack.c.l.b16 %v2248
      %v2592 = vunpack.c.h.b16 %v2248
      %v2593 = vunpack.c.l.b16 %v2249
      %v2594 = vunpack.c.h.b16 %v2249
      %v2595 = vunpack.c.l.b16 %v2250
      %v2596 = vunpack.c.h.b16 %v2250
      %v2597 = vunpack.c.l.b16 %v2251
      %v2598 = vunpack.c.h.b16 %v2251
      %v2599 = vunpack.c.l.b16 %v2252
      %v2600 = vunpack.c.h.b16 %v2252
      %v2601 = vunpack.c.l.b16 %v2253
      %v2602 = vunpack.c.h.b16 %v2253
      %v2603 = vunpack.c.l.b16 %v2254
      %v2604 = vunpack.c.h.b16 %v2254
      %v2605 = vunpack.c.l.b16 %v2255
      %v2606 = vunpack.c.h.b16 %v2255
      %v2607 = vunpack.c.l.b16 %v2256
      %v2608 = vunpack.c.h.b16 %v2256
      %v2609 = vunpack.c.l.b16 %v2257
      %v2610 = vunpack.c.h.b16 %v2257
      %v2611 = vunpack.c.l.b16 %v2258
      %v2612 = vunpack.c.h.b16 %v2258
      %v2613 = vunpack.c.l.b16 %v2259
      %v2614 = vunpack.c.h.b16 %v2259
      %v2615 = vunpack.c.l.b16 %v2260
      %v2616 = vunpack.c.h.b16 %v2260
      %v2617 = vunpack.c.l.b16 %v2261
      %v2618 = vunpack.c.h.b16 %v2261
      %v2619 = vunpack.c.l.b16 %v2262
      %v2620 = vunpack.c.h.b16 %v2262
      %v2621 = vunpack.c.l.b16 %v2263
      %v2622 = vunpack.c.h.b16 %v2263
      %v2623 = vunpack.c.l.b16 %v2264
      %v2624 = vunpack.c.h.b16 %v2264
      %v2625 = vunpack.c.l.b16 %v2265
      %v2626 = vunpack.c.h.b16 %v2265
      %v2627 = vunpack.c.l.b16 %v2266
      %v2628 = vunpack.c.h.b16 %v2266
      %v2629 = vunpack.c.l.b16 %v2267
      %v2630 = vunpack.c.h.b16 %v2267
      %v2631 = vunpack.c.l.b16 %v2268
      %v2632 = vunpack.c.h.b16 %v2268
      %v2633 = vunpack.c.l.b16 %v2269
      %v2634 = vunpack.c.h.b16 %v2269
      %v2635 = vunpack.c.l.b16 %v2270
      %v2636 = vunpack.c.h.b16 %v2270
      %v2637 = vunpack.c.l.b16 %v2271
      %v2638 = vunpack.c.h.b16 %v2271
      %v2639 = vunpack.c.l.b16 %v2272
      %v2640 = vunpack.c.h.b16 %v2272
      %v2641 = vunpack.c.l.b16 %v2273
      %v2642 = vunpack.c.h.b16 %v2273
      %v2643 = vunpack.c.l.b16 %v2274
      %v2644 = vunpack.c.h.b16 %v2274
      %v2645 = vunpack.c.l.b16 %v2275
      %v2646 = vunpack.c.h.b16 %v2275
      %v2647 = vunpack.c.l.b16 %v2276
      %v2648 = vunpack.c.h.b16 %v2276
      %v2649 = vunpack.c.l.b16 %v2277
      %v2650 = vunpack.c.h.b16 %v2277
      %v2651 = vunpack.c.l.b16 %v2278
      %v2652 = vunpack.c.h.b16 %v2278
      %v2653 = vunpack.c.l.b16 %v2279
      %v2654 = vunpack.c.h.b16 %v2279
      %v2655 = vunpack.c.l.b16 %v2280
      %v2656 = vunpack.c.h.b16 %v2280
      %v2657 = vunpack.c.l.b16 %v2281
      %v2658 = vunpack.c.h.b16 %v2281
      %v2659 = vunpack.c.l.b16 %v2282
      %v2660 = vunpack.c.h.b16 %v2282
      %v2661 = vunpack.c.l.b16 %v2283
      %v2662 = vunpack.c.h.b16 %v2283
      %v2663 = vunpack.c.l.b16 %v2284
      %v2664 = vunpack.c.h.b16 %v2284
      %v2665 = vunpack.c.l.b16 %v2285
      %v2666 = vunpack.c.h.b16 %v2285
      %v2667 = vunpack.c.l.b16 %v2286
      %v2668 = vunpack.c.h.b16 %v2286
      %v2669 = vunpack.c.l.b16 %v2287
      %v2670 = vunpack.c.h.b16 %v2287
      %v2671 = vunpack.c.l.b16 %v2288
      %v2672 = vunpack.c.h.b16 %v2288
      %v2673 = vpack.c.b16 %v2425, %v2417
      %v2674 = vpack.c.b16 %v2426, %v2418
      %v2675 = vpack.c.b16 %v2427, %v2419
      %v2676 = vpack.c.b16 %v2428, %v2420
      %v2677 = vpack.c.b16 %v2429, %v2421
      %v2678 = vpack.c.b16 %v2430, %v2422
      %v2679 = vpack.c.b16 %v2431, %v2423
      %v2680 = vpack.c.b16 %v2432, %v2424
      %v2681 = vpack.c.b16 %v2441, %v2433
      %v2682 = vpack.c.b16 %v2442, %v2434
      %v2683 = vpack.c.b16 %v2443, %v2435
      %v2684 = vpack.c.b16 %v2444, %v2436
      %v2685 = vpack.c.b16 %v2445, %v2437
      %v2686 = vpack.c.b16 %v2446, %v2438
      %v2687 = vpack.c.b16 %v2447, %v2439
      %v2688 = vpack.c.b16 %v2448, %v2440
      %v2689 = vpack.c.b16 %v2457, %v2449
      %v2690 = vpack.c.b16 %v2458, %v2450
      %v2691 = vpack.c.b16 %v2459, %v2451
      %v2692 = vpack.c.b16 %v2460, %v2452
      %v2693 = vpack.c.b16 %v2461, %v2453
      %v2694 = vpack.c.b16 %v2462, %v2454
      %v2695 = vpack.c.b16 %v2463, %v2455
      %v2696 = vpack.c.b16 %v2464, %v2456
      %v2697 = vpack.c.b16 %v2473, %v2465
      %v2698 = vpack.c.b16 %v2474, %v2466
      %v2699 = vpack.c.b16 %v2475, %v2467
      %v2700 = vpack.c.b16 %v2476, %v2468
      %v2701 = vpack.c.b16 %v2477, %v2469
      %v2702 = vpack.c.b16 %v2478, %v2470
      %v2703 = vpack.c.b16 %v2479, %v2471
      %v2704 = vpack.c.b16 %v2480, %v2472
      %v2705 = vpack.c.b16 %v2489, %v2481
      %v2706 = vpack.c.b16 %v2490, %v2482
      %v2707 = vpack.c.b16 %v2491, %v2483
      %v2708 = vpack.c.b16 %v2492, %v2484
      %v2709 = vpack.c.b16 %v2493, %v2485
      %v2710 = vpack.c.b16 %v2494, %v2486
      %v2711 = vpack.c.b16 %v2495, %v2487
      %v2712 = vpack.c.b16 %v2496, %v2488
      %v2713 = vpack.c.b16 %v2505, %v2497
      %v2714 = vpack.c.b16 %v2506, %v2498
      %v2715 = vpack.c.b16 %v2507, %v2499
      %v2716 = vpack.c.b16 %v2508, %v2500
      %v2717 = vpack.c.b16 %v2509, %v2501
      %v2718 = vpack.c.b16 %v2510, %v2502
      %v2719 = vpack.c.b16 %v2511, %v2503
      %v2720 = vpack.c.b16 %v2512, %v2504
      %v2721 = vpack.c.b16 %v2521, %v2513
      %v2722 = vpack.c.b16 %v2522, %v2514
      %v2723 = vpack.c.b16 %v2523, %v2515
      %v2724 = vpack.c.b16 %v2524, %v2516
      %v2725 = vpack.c.b16 %v2525, %v2517
      %v2726 = vpack.c.b16 %v2526, %v2518
      %v2727 = vpack.c.b16 %v2527, %v2519
      %v2728 = vpack.c.b16 %v2528, %v2520
      %v2729 = vpack.c.b16 %v2537, %v2529
      %v2730 = vpack.c.b16 %v2538, %v2530
      %v2731 = vpack.c.b16 %v2539, %v2531
      %v2732 = vpack.c.b16 %v2540, %v2532
      %v2733 = vpack.c.b16 %v2541, %v2533
      %v2734 = vpack.c.b16 %v2542, %v2534
      %v2735 = vpack.c.b16 %v2543, %v2535
      %v2736 = vpack.c.b16 %v2544, %v2536
      %v2737 = vpack.c.b16 %v2553, %v2545
      %v2738 = vpack.c.b16 %v2554, %v2546
      %v2739 = vpack.c.b16 %v2555, %v2547
      %v2740 = vpack.c.b16 %v2556, %v2548
      %v2741 = vpack.c.b16 %v2557, %v2549
      %v2742 = vpack.c.b16 %v2558, %v2550
      %v2743 = vpack.c.b16 %v2559, %v2551
      %v2744 = vpack.c.b16 %v2560, %v2552
      %v2745 = vpack.c.b16 %v2569, %v2561
      %v2746 = vpack.c.b16 %v2570, %v2562
      %v2747 = vpack.c.b16 %v2571, %v2563
      %v2748 = vpack.c.b16 %v2572, %v2564
      %v2749 = vpack.c.b16 %v2573, %v2565
      %v2750 = vpack.c.b16 %v2574, %v2566
      %v2751 = vpack.c.b16 %v2575, %v2567
      %v2752 = vpack.c.b16 %v2576, %v2568
      %v2753 = vpack.c.b16 %v2585, %v2577
      %v2754 = vpack.c.b16 %v2586, %v2578
      %v2755 = vpack.c.b16 %v2587, %v2579
      %v2756 = vpack.c.b16 %v2588, %v2580
      %v2757 = vpack.c.b16 %v2589, %v2581
      %v2758 = vpack.c.b16 %v2590, %v2582
      %v2759 = vpack.c.b16 %v2591, %v2583
      %v2760 = vpack.c.b16 %v2592, %v2584
      %v2761 = vpack.c.b16 %v2601, %v2593
      %v2762 = vpack.c.b16 %v2602, %v2594
      %v2763 = vpack.c.b16 %v2603, %v2595
      %v2764 = vpack.c.b16 %v2604, %v2596
      %v2765 = vpack.c.b16 %v2605, %v2597
      %v2766 = vpack.c.b16 %v2606, %v2598
      %v2767 = vpack.c.b16 %v2607, %v2599
      %v2768 = vpack.c.b16 %v2608, %v2600
      %v2769 = vpack.c.b16 %v2617, %v2609
      %v2770 = vpack.c.b16 %v2618, %v2610
      %v2771 = vpack.c.b16 %v2619, %v2611
      %v2772 = vpack.c.b16 %v2620, %v2612
      %v2773 = vpack.c.b16 %v2621, %v2613
      %v2774 = vpack.c.b16 %v2622, %v2614
      %v2775 = vpack.c.b16 %v2623, %v2615
      %v2776 = vpack.c.b16 %v2624, %v2616
      %v2777 = vpack.c.b16 %v2633, %v2625
      %v2778 = vpack.c.b16 %v2634, %v2626
      %v2779 = vpack.c.b16 %v2635, %v2627
      %v2780 = vpack.c.b16 %v2636, %v2628
      %v2781 = vpack.c.b16 %v2637, %v2629
      %v2782 = vpack.c.b16 %v2638, %v2630
      %v2783 = vpack.c.b16 %v2639, %v2631
      %v2784 = vpack.c.b16 %v2640, %v2632
      %v2785 = vpack.c.b16 %v2649, %v2641
      %v2786 = vpack.c.b16 %v2650, %v2642
      %v2787 = vpack.c.b16 %v2651, %v2643
      %v2788 = vpack.c.b16 %v2652, %v2644
      %v2789 = vpack.c.b16 %v2653, %v2645
      %v2790 = vpack.c.b16 %v2654, %v2646
      %v2791 = vpack.c.b16 %v2655, %v2647
      %v2792 = vpack.c.b16 %v2656, %v2648
      %v2793 = vpack.c.b16 %v2665, %v2657
      %v2794 = vpack.c.b16 %v2666, %v2658
      %v2795 = vpack.c.b16 %v2667, %v2659
      %v2796 = vpack.c.b16 %v2668, %v2660
      %v2797 = vpack.c.b16 %v2669, %v2661
      %v2798 = vpack.c.b16 %v2670, %v2662
      %v2799 = vpack.c.b16 %v2671, %v2663
      %v2800 = vpack.c.b16 %v2672, %v2664
      %2929 = vmatprep.subr.bf16.mxu0 %v2730
      %2930 = vmatpush1.bf16.msra.mxu0 %v2729
      %2931 = vmatprep.subr.bf16.mxu0 %v2722
      %2932 = vmatpush1.bf16.msra.mxu0 %v2721
      %2933 = vmatprep.subr.bf16.mxu0 %v2714
      %2934 = vmatpush1.bf16.msra.mxu0 %v2713
      %2935 = vmatprep.subr.bf16.mxu0 %v2706
      %2936 = vmatpush1.bf16.msra.mxu0 %v2705
      %2937 = vmatprep.subr.bf16.mxu0 %v2698
      %2938 = vmatpush1.bf16.msra.mxu0 %v2697
      %2939 = vmatprep.subr.bf16.mxu0 %v2690
      %2940 = vmatpush1.bf16.msra.mxu0 %v2689
      %2941 = vmatprep.subr.bf16.mxu0 %v2682
      %2942 = vmatpush1.bf16.msra.mxu0 %v2681
      %2943 = vmatprep.subr.bf16.mxu0 %v2674
      %2944 = vmatpush1.bf16.msra.mxu0 %v2673
      %2945 = vmatprep.subr.bf16.mxu0 %v2794
      %2946 = vmatpush2.bf16.msra.mxu0 %v2793
      %2947 = vmatprep.subr.bf16.mxu0 %v2786
      %2948 = vmatpush2.bf16.msra.mxu0 %v2785
      %2949 = vmatprep.subr.bf16.mxu0 %v2778
      %2950 = vmatpush2.bf16.msra.mxu0 %v2777
      %2951 = vmatprep.subr.bf16.mxu0 %v2770
      %2952 = vmatpush2.bf16.msra.mxu0 %v2769
      %2953 = vmatprep.subr.bf16.mxu0 %v2762
      %2954 = vmatpush2.bf16.msra.mxu0 %v2761
      %2955 = vmatprep.subr.bf16.mxu0 %v2754
      %2956 = vmatpush2.bf16.msra.mxu0 %v2753
      %2957 = vmatprep.subr.bf16.mxu0 %v2746
      %2958 = vmatpush2.bf16.msra.mxu0 %v2745
      %2959 = vmatprep.subr.bf16.mxu0 %v2738
      %2960 = vmatpush2.bf16.msra.mxu0 %v2737
      %2961 = vmatprep.mubr.bf16.mxu0 %v2160
      %2962 = vmatmul.mubr.bf16.gmra.mxu0 %v2159
      %v2963 = vpop.f32.mrf.mxu0
      %v2964 = vadd.f32 0.0, %v2963
      %v2965 = vpop.f32.mrf.mxu0
      %v2966 = vadd.f32 0.0, %v2965
      %v2967 = vpop.f32.mrf.mxu0
      %v2968 = vpop.f32.mrf.mxu0
      %2969 = vdwg.mxu0
      %2970 = vmatprep.subr.bf16.mxu0 %v2732
      %2971 = vmatpush1.bf16.msra.mxu0 %v2731
      %2972 = vmatprep.subr.bf16.mxu0 %v2724
      %2973 = vmatpush1.bf16.msra.mxu0 %v2723
      %2974 = vmatprep.subr.bf16.mxu0 %v2716
      %2975 = vmatpush1.bf16.msra.mxu0 %v2715
      %2976 = vmatprep.subr.bf16.mxu0 %v2708
      %2977 = vmatpush1.bf16.msra.mxu0 %v2707
      %2978 = vmatprep.subr.bf16.mxu0 %v2700
      %2979 = vmatpush1.bf16.msra.mxu0 %v2699
      %2980 = vmatprep.subr.bf16.mxu0 %v2692
      %2981 = vmatpush1.bf16.msra.mxu0 %v2691
      %2982 = vmatprep.subr.bf16.mxu0 %v2684
      %2983 = vmatpush1.bf16.msra.mxu0 %v2683
      %2984 = vmatprep.subr.bf16.mxu0 %v2676
      %2985 = vmatpush1.bf16.msra.mxu0 %v2675
      %2986 = vmatprep.subr.bf16.mxu0 %v2796
      %2987 = vmatpush2.bf16.msra.mxu0 %v2795
      %2988 = vmatprep.subr.bf16.mxu0 %v2788
      %2989 = vmatpush2.bf16.msra.mxu0 %v2787
      %2990 = vmatprep.subr.bf16.mxu0 %v2780
      %2991 = vmatpush2.bf16.msra.mxu0 %v2779
      %2992 = vmatprep.subr.bf16.mxu0 %v2772
      %2993 = vmatpush2.bf16.msra.mxu0 %v2771
      %2994 = vmatprep.subr.bf16.mxu0 %v2764
      %2995 = vmatpush2.bf16.msra.mxu0 %v2763
      %2996 = vmatprep.subr.bf16.mxu0 %v2756
      %2997 = vmatpush2.bf16.msra.mxu0 %v2755
      %2998 = vmatprep.subr.bf16.mxu0 %v2748
      %2999 = vmatpush2.bf16.msra.mxu0 %v2747
      %3000 = vmatprep.subr.bf16.mxu0 %v2740
      %3001 = vmatpush2.bf16.msra.mxu0 %v2739
      %3002 = vmatprep.mubr.bf16.mxu0 %v2160
      %3003 = vmatmul.mubr.bf16.gmra.mxu0 %v2159
      %v3004 = vpop.f32.mrf.mxu0
      %v3005 = vadd.f32 0.0, %v3004
      %v3006 = vpop.f32.mrf.mxu0
      %v3007 = vadd.f32 0.0, %v3006
      %v3008 = vpop.f32.mrf.mxu0
      %v3009 = vpop.f32.mrf.mxu0
      %3010 = vdwg.mxu0
      %3011 = vmatprep.subr.bf16.mxu0 %v2734
      %3012 = vmatpush1.bf16.msra.mxu0 %v2733
      %3013 = vmatprep.subr.bf16.mxu0 %v2726
      %3014 = vmatpush1.bf16.msra.mxu0 %v2725
      %3015 = vmatprep.subr.bf16.mxu0 %v2718
      %3016 = vmatpush1.bf16.msra.mxu0 %v2717
      %3017 = vmatprep.subr.bf16.mxu0 %v2710
      %3018 = vmatpush1.bf16.msra.mxu0 %v2709
      %3019 = vmatprep.subr.bf16.mxu0 %v2702
      %3020 = vmatpush1.bf16.msra.mxu0 %v2701
      %3021 = vmatprep.subr.bf16.mxu0 %v2694
      %3022 = vmatpush1.bf16.msra.mxu0 %v2693
      %3023 = vmatprep.subr.bf16.mxu0 %v2686
      %3024 = vmatpush1.bf16.msra.mxu0 %v2685
      %3025 = vmatprep.subr.bf16.mxu0 %v2678
      %3026 = vmatpush1.bf16.msra.mxu0 %v2677
      %3027 = vmatprep.subr.bf16.mxu0 %v2798
      %3028 = vmatpush2.bf16.msra.mxu0 %v2797
      %3029 = vmatprep.subr.bf16.mxu0 %v2790
      %3030 = vmatpush2.bf16.msra.mxu0 %v2789
      %3031 = vmatprep.subr.bf16.mxu0 %v2782
      %3032 = vmatpush2.bf16.msra.mxu0 %v2781
      %3033 = vmatprep.subr.bf16.mxu0 %v2774
      %3034 = vmatpush2.bf16.msra.mxu0 %v2773
      %3035 = vmatprep.subr.bf16.mxu0 %v2766
      %3036 = vmatpush2.bf16.msra.mxu0 %v2765
      %3037 = vmatprep.subr.bf16.mxu0 %v2758
      %3038 = vmatpush2.bf16.msra.mxu0 %v2757
      %3039 = vmatprep.subr.bf16.mxu0 %v2750
      %3040 = vmatpush2.bf16.msra.mxu0 %v2749
      %3041 = vmatprep.subr.bf16.mxu0 %v2742
      %3042 = vmatpush2.bf16.msra.mxu0 %v2741
      %3043 = vmatprep.mubr.bf16.mxu0 %v2160
      %3044 = vmatmul.mubr.bf16.gmra.mxu0 %v2159
      %v3045 = vpop.f32.mrf.mxu0
      %v3046 = vadd.f32 0.0, %v3045
      %v3047 = vpop.f32.mrf.mxu0
      %v3048 = vadd.f32 0.0, %v3047
      %v3049 = vpop.f32.mrf.mxu0
      %v3050 = vpop.f32.mrf.mxu0
      %3051 = vdwg.mxu0
      %3052 = vmatprep.subr.bf16.mxu0 %v2736
      %3053 = vmatpush1.bf16.msra.mxu0 %v2735
      %3054 = vmatprep.subr.bf16.mxu0 %v2728
      %3055 = vmatpush1.bf16.msra.mxu0 %v2727
      %3056 = vmatprep.subr.bf16.mxu0 %v2720
      %3057 = vmatpush1.bf16.msra.mxu0 %v2719
      %3058 = vmatprep.subr.bf16.mxu0 %v2712
      %3059 = vmatpush1.bf16.msra.mxu0 %v2711
      %3060 = vmatprep.subr.bf16.mxu0 %v2704
      %3061 = vmatpush1.bf16.msra.mxu0 %v2703
      %3062 = vmatprep.subr.bf16.mxu0 %v2696
      %3063 = vmatpush1.bf16.msra.mxu0 %v2695
      %3064 = vmatprep.subr.bf16.mxu0 %v2688
      %3065 = vmatpush1.bf16.msra.mxu0 %v2687
      %3066 = vmatprep.subr.bf16.mxu0 %v2680
      %3067 = vmatpush1.bf16.msra.mxu0 %v2679
      %3068 = vmatprep.subr.bf16.mxu0 %v2800
      %3069 = vmatpush2.bf16.msra.mxu0 %v2799
      %3070 = vmatprep.subr.bf16.mxu0 %v2792
      %3071 = vmatpush2.bf16.msra.mxu0 %v2791
      %3072 = vmatprep.subr.bf16.mxu0 %v2784
      %3073 = vmatpush2.bf16.msra.mxu0 %v2783
      %3074 = vmatprep.subr.bf16.mxu0 %v2776
      %3075 = vmatpush2.bf16.msra.mxu0 %v2775
      %3076 = vmatprep.subr.bf16.mxu0 %v2768
      %3077 = vmatpush2.bf16.msra.mxu0 %v2767
      %3078 = vmatprep.subr.bf16.mxu0 %v2760
      %3079 = vmatpush2.bf16.msra.mxu0 %v2759
      %3080 = vmatprep.subr.bf16.mxu0 %v2752
      %3081 = vmatpush2.bf16.msra.mxu0 %v2751
      %3082 = vmatprep.subr.bf16.mxu0 %v2744
      %3083 = vmatpush2.bf16.msra.mxu0 %v2743
      %3084 = vmatprep.mubr.bf16.mxu0 %v2160
      %3085 = vmatmul.mubr.bf16.gmra.mxu0 %v2159
      %v3086 = vpop.f32.mrf.mxu0
      %v3087 = vadd.f32 0.0, %v3086
      %v3088 = vpop.f32.mrf.mxu0
      %v3089 = vadd.f32 0.0, %v3088
      %v3090 = vpop.f32.mrf.mxu0
      %v3091 = vpop.f32.mrf.mxu0
      %3092 = vdwg.mxu0
      %v3094 = vlaneseq
      %v3095 = vshrl.u32 %v3094, 7
      %v3096 = vsub.s32 0, %v3095
      %v3097 = vrot.slane %v2156, %v3096
      %v3098 = vlaneseq
      %v3099 = vshrl.u32 %v3098, 7
      %v3100 = vsub.s32 1, %v3099
      %v3101 = vrot.slane %v2156, %v3100
      %v3102 = vlaneseq
      %v3103 = vshrl.u32 %v3102, 7
      %v3104 = vsub.s32 2, %v3103
      %v3105 = vrot.slane %v2156, %v3104
      %v3106 = vlaneseq
      %v3107 = vshrl.u32 %v3106, 7
      %v3108 = vsub.s32 3, %v3107
      %v3109 = vrot.slane %v2156, %v3108
      %v3110 = vlaneseq
      %v3111 = vshrl.u32 %v3110, 7
      %v3112 = vsub.s32 4, %v3111
      %v3113 = vrot.slane %v2156, %v3112
      %v3114 = vlaneseq
      %v3115 = vshrl.u32 %v3114, 7
      %v3116 = vsub.s32 5, %v3115
      %v3117 = vrot.slane %v2156, %v3116
      %v3118 = vlaneseq
      %v3119 = vshrl.u32 %v3118, 7
      %v3120 = vsub.s32 6, %v3119
      %v3121 = vrot.slane %v2156, %v3120
      %v3122 = vlaneseq
      %v3123 = vshrl.u32 %v3122, 7
      %v3124 = vsub.s32 7, %v3123
      %v3125 = vrot.slane %v2156, %v3124
      %v3134 = vadd.f32 %v3097, %v2964
      %v3135 = vadd.f32 %v3101, %v2966
      %v3136 = vadd.f32 %v3105, %v3005
      %v3137 = vadd.f32 %v3109, %v3007
      %v3138 = vadd.f32 %v3113, %v3046
      %v3139 = vadd.f32 %v3117, %v3048
      %v3140 = vadd.f32 %v3121, %v3087
      %v3141 = vadd.f32 %v3125, %v3089
      %v3142 = vld [vmem:[#allocation3] sm:$0xff]
      %v3143 = vld [vmem:[#allocation3 + $0x8] sm:$0xff]
      %v3144 = vxor.u32 %v3134, 2147483648
      %v3145 = vxor.u32 %v3135, 2147483648
      %v3146 = vmul.f32 %v3144, 1.442695
      %v3147 = vpow.pop %v3146
      %v3148 = vmul.f32 %v3145, 1.442695
      %v3149 = vpow.pop %v3148
      %v3150 = vadd.f32 %v3147, 1.0
      %v3151 = vadd.f32 %v3149, 1.0
      %v3152 = vrcp.pop %v3150
      %v3153 = vmul.f32 1.0, %v3152
      %v3154 = vrcp.pop %v3151
      %v3155 = vmul.f32 1.0, %v3154
      %v3156 = vxor.u32 %v3136, 2147483648
      %v3157 = vxor.u32 %v3137, 2147483648
      %v3158 = vmul.f32 %v3156, 1.442695
      %v3159 = vpow.pop %v3158
      %v3160 = vmul.f32 %v3157, 1.442695
      %v3161 = vpow.pop %v3160
      %v3162 = vadd.f32 %v3159, 1.0
      %v3163 = vadd.f32 %v3161, 1.0
      %v3164 = vrcp.pop %v3162
      %v3165 = vmul.f32 1.0, %v3164
      %v3166 = vrcp.pop %v3163
      %v3167 = vmul.f32 1.0, %v3166
      %v3168 = vtanh.pop %v3138
      %v3169 = vtanh.pop %v3139
      %v3170 = vxor.u32 %v3140, 2147483648
      %v3171 = vxor.u32 %v3141, 2147483648
      %v3172 = vmul.f32 %v3170, 1.442695
      %v3173 = vpow.pop %v3172
      %v3174 = vmul.f32 %v3171, 1.442695
      %v3175 = vpow.pop %v3174
      %v3176 = vadd.f32 %v3173, 1.0
      %v3177 = vadd.f32 %v3175, 1.0
      %v3178 = vrcp.pop %v3176
      %v3179 = vmul.f32 1.0, %v3178
      %v3180 = vrcp.pop %v3177
      %v3181 = vmul.f32 1.0, %v3180
      %v3182 = vmul.f32 %v3165, %v3142
      %v3183 = vmul.f32 %v3167, %v3143
      %v3184 = vmul.f32 %v3153, %v3168
      %v3185 = vmul.f32 %v3155, %v3169
      %v3186 = vadd.f32 %v3182, %v3184
      %v3187 = vadd.f32 %v3183, %v3185
      %v3188 = vtanh.pop %v3186
      %v3189 = vtanh.pop %v3187
      %v3190 = vmul.f32 %v3179, %v3188
      %v3191 = vmul.f32 %v3181, %v3189
      %v3192 = vxor.u32 %v3190, 2147483648
      %v3193 = vxor.u32 %v3191, 2147483648
      %v3194 = vmul.f32 %v3192, 1.442695
      %v3195 = vpow.pop %v3194
      %v3196 = vmul.f32 %v3193, 1.442695
      %v3197 = vpow.pop %v3196
      %v3198 = vadd.f32 %v3195, 1.0
      %v3199 = vadd.f32 %v3197, 1.0
      %v3200 = vrcp.pop %v3198
      %v3201 = vmul.f32 1.0, %v3200
      %v3202 = vrcp.pop %v3199
      %v3203 = vmul.f32 1.0, %v3202
      %3204 = vst [vmem:[#allocation2] sm:$0xff] %v3201
      %3205 = vst [vmem:[#allocation2 + $0x8] sm:$0xff] %v3203
      %3206 = vst [vmem:[#allocation3] sm:$0xff] %v3186
      %3207 = vst [vmem:[#allocation3 + $0x8] sm:$0xff] %v3187
      %s3208 = smul.u32 %s2151, 2
      %s3209 = smul.addr %s3208, 8
      %s3210 = scalar_lea.vmem [#allocation12], %s3209
      %3211 = vst [vmem:[%s3210] sm:$0xff] %v3201
      %3212 = vst [vmem:[%s3210 + $0x8] sm:$0xff] %v3203
    $region45: #{tpu_custom_call.1} parent=1 // loop_footer
      %s2155 = sadd.s32 1, %s2151
    $region46: #{tpu_custom_call.1} parent=1 // loop_footer_branch
      %2150 = sbr.rel target = $region42
    $region47: #{tpu_custom_call.1} parent=1 // loop_exit
      _
    // Predicated region
    $region48: #{tpu_custom_call.1} parent=1 // pred_check
      _
    $region49: #{tpu_custom_call.1} parent=1 // pred_check_branch
      %3214 = sbr.rel (0) target = $region51
    $region50: #{tpu_custom_call.1} parent=1 // pred_region
      %s3216 = ssub.s32 1024, 1024
      %3217 = vsyncadd [#allocation6], %s3216
      %s3218 = sshll.u32 [#allocation12], 4
      %s3219 = int_to_ptr.vmem [resolvable:$true] %s3218
      %3224 = dma.vmem_to_hbm [thread:$0]  %s3219, 1024, %s4, [#allocation6], 256, 256, 16
    $region51: #{tpu_custom_call.1} parent=1 // pred_fallthru
      _
    // Predicated region
    $region52: #{tpu_custom_call.1} parent=1 // pred_check
      _
    $region53: #{tpu_custom_call.1} parent=1 // pred_check_branch
      %3226 = sbr.rel (0) target = $region55
    $region54: #{tpu_custom_call.1} parent=1 // pred_region
      %3227 = dma.done [#allocation6], 1024
    $region55: #{tpu_custom_call.1} parent=1 // pred_fallthru
      _
    %3228 = vsyncpa [#allocation5], 1
    %3229 = vsyncpa [#allocation8], 1
    %3230 = vsyncpa [#allocation11], 1
    %3231 = vsyncpa [#allocation6], 1

</llo_original>
